<compile_context>
chip_gen: v5e
topology: v5e:2x2
jax: 0.10.0
libtpu: 0.0.40
codegen_flags: <defaults>
</compile_context>

<pallas_src>
import functools

import numpy as np
import jax
import jax.numpy as jnp
from jax.experimental import pallas as pl
from jax.experimental.pallas import tpu as pltpu

_BN_EPS = 1e-5
LANE = 128                      # lane (last-dim) padding target


def _softplus(x):
    # numerically stable log(1 + exp(x)) (torch.nn.Softplus, beta=1)
    return jnp.maximum(x, 0.0) + jnp.log1p(jnp.exp(-jnp.abs(x)))


def _bn(x, gamma, beta, mean, var):
    return (x - mean) * jax.lax.rsqrt(var + _BN_EPS) * gamma + beta


def _pad2(x, rows, cols):
    out = jnp.zeros((rows, cols), jnp.float32)
    return out.at[: x.shape[0], : x.shape[1]].set(x.astype(jnp.float32))


# ---------------- fused forward kernel ----------------
def _cgcnn_kernel(atom_ref,            # (Npad, P)      padded raw atom features
                  edge_ref,            # (M*Npad, P)    padded bond features, m-major
                  onehot_ref,          # (M*Npad, Npad) neighbor one-hot gather matrix
                  pool_ref,            # (C, Npad)      crystal mean-pooling weights
                  wemb_ref, bemb_ref,  # (P, P), (1, P)
                  ws_ref, wn_ref, we_ref,   # (L, P, 2P) each (bn1 folded in)
                  b1_ref,              # (L, 1, 2P) folded bn1 shift
                  s2_ref, t2_ref,      # (L, 1, P)  folded bn2 scale / shift
                  out_ref,             # (C, P)
                  *, n_conv, M, Npad, A):
    P = LANE

    # mask for valid feature lanes [0, A); keeps padded lanes of x exactly zero
    lane = jax.lax.broadcasted_iota(jnp.int32, (1, P), 1)
    lane_mask = (lane < A).astype(jnp.float32)

    edge = edge_ref[...]                 # read once; reused by every layer
    onehot = onehot_ref[...]

    # embedding: x = atom @ W_emb^T + b  (all lane-padded to 128)
    x = jnp.dot(atom_ref[...], wemb_ref[...],
                preferred_element_type=jnp.float32) + bemb_ref[...]
    x = x * lane_mask

    for l in range(n_conv):              # n_conv is small & static
        # per-source-row contributions (one matmul each per layer)
        hs = jnp.dot(x, ws_ref[l], preferred_element_type=jnp.float32) + b1_ref[l]
        hn = jnp.dot(x, wn_ref[l], preferred_element_type=jnp.float32)

        # bond contributions for all M*Npad pairs in ONE matmul (hoisted out of m loop)
        he = jnp.dot(edge, we_ref[l], preferred_element_type=jnp.float32)

        # neighbor gather for all pairs as ONE one-hot MXU matmul
        gat = jnp.dot(onehot, hn, preferred_element_type=jnp.float32)

        ghe = gat + he                   # (M*Npad, 2P), pairs m-major

        acc = jnp.zeros((Npad, P), jnp.float32)      # sum over neighbor slots
        for m in range(M):                            # M is small & static; pure VPU/EUP
            g = ghe[m * Npad:(m + 1) * Npad, :] + hs
            # lane-aligned split: filter half = lanes [0,128), core half = [128,256)
            filt = pl.reciprocal(1.0 + jnp.exp(-g[:, :P]), approx=True)  # sigmoid on EUP
            core = _softplus(g[:, P:])
            acc = acc + filt * core

        ns = acc * s2_ref[l] + t2_ref[l]              # folded bn2
        x = _softplus(x + ns) * lane_mask

    # crystal pooling (mean per crystal) as one tiny matmul
    out_ref[...] = jnp.dot(pool_ref[...], x, preferred_element_type=jnp.float32)


# ---------------- parameter preparation (pad + fold BN) ----------------
def _prepare_params(params, A):
    P = LANE
    w_emb = params['w_emb']                     # (A, orig)
    wemb_p = _pad2(w_emb.T, P, P)
    bemb_p = _pad2(params['b_emb'][None, :], 1, P)

    ws_l, wn_l, we_l, b1_l, s2_l, t2_l = [], [], [], [], [], []
    for cp in params['convs']:
        Wt = cp['w_full'].T                     # (2A + B, 2A)
        s1 = cp['bn1_gamma'] * jax.lax.rsqrt(cp['bn1_var'] + _BN_EPS)
        t1 = cp['bn1_beta'] - cp['bn1_mean'] * s1
        Wt = Wt * s1[None, :]                   # fold bn1 scale into fc_full

        def split_pad(block):                   # (rows, 2A) -> (P, 2P), lane-aligned halves
            out = jnp.zeros((P, 2 * P), jnp.float32)
            out = out.at[: block.shape[0], :A].set(block[:, :A])          # filter half
            out = out.at[: block.shape[0], P:P + A].set(block[:, A:])     # core half
            return out

        ws_l.append(split_pad(Wt[:A]))          # weights hitting self features
        wn_l.append(split_pad(Wt[A:2 * A]))     # weights hitting gathered neighbor feats
        we_l.append(split_pad(Wt[2 * A:]))      # weights hitting bond features

        b1 = jnp.zeros((1, 2 * P), jnp.float32)
        b1 = b1.at[0, :A].set(t1[:A]).at[0, P:P + A].set(t1[A:])
        b1_l.append(b1)

        s2 = cp['bn2_gamma'] * jax.lax.rsqrt(cp['bn2_var'] + _BN_EPS)
        t2 = cp['bn2_beta'] - cp['bn2_mean'] * s2
        s2_l.append(_pad2(s2[None, :], 1, P))
        t2_l.append(_pad2(t2[None, :], 1, P))

    return (wemb_p, bemb_p,
            jnp.stack(ws_l), jnp.stack(wn_l), jnp.stack(we_l),
            jnp.stack(b1_l), jnp.stack(s2_l), jnp.stack(t2_l))


# ---------------- full CrystalGraphConvNet forward ----------------
def crystal_graph_conv_net(atom_fea, nbr_fea, nbr_fea_idx, crystal_atom_idx, params):
    N, M = nbr_fea_idx.shape
    A = params['w_emb'].shape[0]
    B = nbr_fea.shape[-1]
    P = LANE
    n_conv = len(params['convs'])
    Npad = ((N + 7) // 8) * 8                   # sublane-aligned atom-row count

    # lane-pad atom features
    atom_p = _pad2(atom_fea, Npad, P)

    # pair data, m-major: row m*Npad + n == (atom n, neighbor slot m)
    edge_m = jnp.zeros((M, Npad, P), jnp.float32)
    edge_m = edge_m.at[:, :N, :B].set(jnp.transpose(nbr_fea, (1, 0, 2)).astype(jnp.float32))
    edge_p = edge_m.reshape(M * Npad, P)

    # neighbor one-hot gather matrix: (onehot @ hn)[m*Npad + n] = hn[nbr_fea_idx[n, m]]
    idx_m = jnp.transpose(nbr_fea_idx).astype(jnp.int32)        # (M, N)
    oh = (idx_m[:, :, None] ==
          jnp.arange(Npad, dtype=jnp.int32)[None, None, :]).astype(jnp.float32)
    onehot_p = jnp.zeros((M, Npad, Npad), jnp.float32).at[:, :N, :].set(oh)
    onehot_p = onehot_p.reshape(M * Npad, Npad)

    # crystal mean-pooling matrix (host-built, trace-time constant)
    C = len(crystal_atom_idx)
    pw = np.zeros((C, Npad), np.float32)
    for ci, idx_map in enumerate(crystal_atom_idx):
        pw[ci, list(idx_map)] = 1.0 / len(idx_map)
    pool_w = jnp.asarray(pw)

    (wemb_p, bemb_p, ws_all, wn_all, we_all,
     b1_all, s2_all, t2_all) = _prepare_params(params, A)

    kernel = functools.partial(_cgcnn_kernel, n_conv=n_conv, M=M, Npad=Npad, A=A)
    vmem = pl.BlockSpec(memory_space=pltpu.MemorySpace.VMEM)

    out = pl.pallas_call(
        kernel,
        out_shape=jax.ShapeDtypeStruct((C, P), jnp.float32),
        in_specs=[vmem] * 12,
        out_specs=vmem,
    )(atom_p, edge_p, onehot_p, pool_w, wemb_p, bemb_p,
      ws_all, wn_all, we_all, b1_all, s2_all, t2_all)

    return out[:, :A]


# ---------------- deterministic parameter init ----------------
def init_params(key, orig_len, nbr_len, A, n_conv):
    keys = iter(jax.random.split(key, 8 + 16 * n_conv))
    params = {
        'w_emb': 0.2 * jax.random.normal(next(keys), (A, orig_len), jnp.float32),
        'b_emb': 0.1 * jax.random.normal(next(keys), (A,), jnp.float32),
        'convs': [],
    }
    for _ in range(n_conv):
        cp = {'w_full': 0.2 * jax.random.normal(next(keys), (2 * A, 2 * A + nbr_len),
                                                jnp.float32)}
        for tag, width in (('bn1', 2 * A), ('bn2', A)):
            cp[tag + '_gamma'] = 1.0 + 0.1 * jax.random.normal(next(keys), (width,), jnp.float32)
            cp[tag + '_beta'] = 0.1 * jax.random.normal(next(keys), (width,), jnp.float32)
            cp[tag + '_mean'] = 0.1 * jax.random.normal(next(keys), (width,), jnp.float32)
            cp[tag + '_var'] = 1.0 + 0.1 * jnp.abs(jax.random.normal(next(keys), (width,),
                                                                     jnp.float32))
        params['convs'].append(cp)
    return params


# ---------------- pure-JAX reference (for verification) ----------------
def reference_forward(atom_fea, nbr_fea, nbr_fea_idx, crystal_atom_idx, params):
    N, M = nbr_fea_idx.shape
    A = params['w_emb'].shape[0]
    x = atom_fea @ params['w_emb'].T + params['b_emb']
    for cp in params['convs']:
        atom_nbr = x[nbr_fea_idx]                                    # (N, M, A)
        total = jnp.concatenate(
            [jnp.broadcast_to(x[:, None, :], (N, M, A)), atom_nbr, nbr_fea], axis=2)
        gated = total @ cp['w_full'].T
        gated = _bn(gated.reshape(N * M, 2 * A), cp['bn1_gamma'], cp['bn1_beta'],
                    cp['bn1_mean'], cp['bn1_var']).reshape(N, M, 2 * A)
        flt = jax.nn.sigmoid(gated[..., :A])
        core = jax.nn.softplus(gated[..., A:])
        ns = jnp.sum(flt * core, axis=1)
        ns = _bn(ns, cp['bn2_gamma'], cp['bn2_beta'], cp['bn2_mean'], cp['bn2_var'])
        x = jax.nn.softplus(x + ns)
    return jnp.stack([x[jnp.asarray(im)].mean(axis=0) for im in crystal_atom_idx], axis=0)


if __name__ == "__main__":
    key = jax.random.PRNGKey(0)

    N, M = 8, 4                    # atoms, neighbors per atom
    orig_atom_fea_len = 16
    nbr_fea_len = 16
    atom_fea_len = 32
    n_conv = 3
    crystal_atom_idx = [list(range(0, 4)), list(range(4, 8))]   # 2 crystals

    k_in, k_par = jax.random.split(key)
    k1, k2, k3 = jax.random.split(k_in, 3)
    atom_fea = jax.random.normal(k1, (N, orig_atom_fea_len), jnp.float32)
    nbr_fea = jax.random.normal(k2, (N, M, nbr_fea_len), jnp.float32)
    nbr_fea_idx = jax.random.randint(k3, (N, M), 0, N, jnp.int32)

    params = init_params(k_par, orig_atom_fea_len, nbr_fea_len, atom_fea_len, n_conv)

    out = crystal_graph_conv_net(atom_fea, nbr_fea, nbr_fea_idx, crystal_atom_idx, params)
    out = jax.block_until_ready(out)

    ref = reference_forward(atom_fea, nbr_fea, nbr_fea_idx, crystal_atom_idx, params)
    assert out.shape == (len(crystal_atom_idx), atom_fea_len)
    np.testing.assert_allclose(np.asarray(out), np.asarray(ref), rtol=1e-2, atol=1e-2)

    print("KERNEL_OK")
</pallas_src>

<mosaic_0001>
module attributes {stable_mosaic.version = 11 : i64} {
  func.func @_cgcnn_kernel(%arg0: memref<8x128xf32, #tpu.memory_space<vmem>>, %arg1: memref<32x128xf32, #tpu.memory_space<vmem>>, %arg2: memref<32x8xf32, #tpu.memory_space<vmem>>, %arg3: memref<2x8xf32, #tpu.memory_space<vmem>>, %arg4: memref<128x128xf32, #tpu.memory_space<vmem>>, %arg5: memref<1x128xf32, #tpu.memory_space<vmem>>, %arg6: memref<3x128x256xf32, #tpu.memory_space<vmem>>, %arg7: memref<3x128x256xf32, #tpu.memory_space<vmem>>, %arg8: memref<3x128x256xf32, #tpu.memory_space<vmem>>, %arg9: memref<3x1x256xf32, #tpu.memory_space<vmem>>, %arg10: memref<3x1x128xf32, #tpu.memory_space<vmem>>, %arg11: memref<3x1x128xf32, #tpu.memory_space<vmem>>, %arg12: memref<2x128xf32, #tpu.memory_space<vmem>>) attributes {dimension_semantics = [], scalar_prefetch = 0 : i64, scratch_operands = 0 : i64, tpu.core_type = #tpu.core_type<tc>} {
    %0 = tpu.iota {dimensions = array<i32: 1>} : vector<1x128xi32>
    %c32_i32 = arith.constant 32 : i32
    %1 = vector.broadcast %c32_i32 : i32 to vector<1x128xi32>
    %2 = arith.cmpi slt, %0, %1 : vector<1x128xi32>
    %3 = arith.extui %2 : vector<1x128xi1> to vector<1x128xi32>
    %4 = arith.sitofp %3 : vector<1x128xi32> to vector<1x128xf32>
    %c0 = arith.constant 0 : index
    %c0_0 = arith.constant 0 : index
    %5 = vector.load %arg1[%c0, %c0_0] : memref<32x128xf32, #tpu.memory_space<vmem>>, vector<32x128xf32>
    %c0_1 = arith.constant 0 : index
    %c0_2 = arith.constant 0 : index
    %6 = vector.load %arg2[%c0_1, %c0_2] : memref<32x8xf32, #tpu.memory_space<vmem>>, vector<32x8xf32>
    %c0_3 = arith.constant 0 : index
    %c0_4 = arith.constant 0 : index
    %7 = vector.load %arg0[%c0_3, %c0_4] : memref<8x128xf32, #tpu.memory_space<vmem>>, vector<8x128xf32>
    %c0_5 = arith.constant 0 : index
    %c0_6 = arith.constant 0 : index
    %8 = vector.load %arg4[%c0_5, %c0_6] : memref<128x128xf32, #tpu.memory_space<vmem>>, vector<128x128xf32>
    %cst = arith.constant dense<0.000000e+00> : vector<8x128xf32>
    %9 = tpu.matmul %7, %8, %cst {dimension_numbers = #tpu.dot_dimension_numbers<[1], [0], [0], [1], [0, 0, 1, 1], [], []>} : vector<8x128xf32>, vector<128x128xf32>, vector<8x128xf32> -> vector<8x128xf32>
    %c0_7 = arith.constant 0 : index
    %c0_8 = arith.constant 0 : index
    %10 = vector.load %arg5[%c0_7, %c0_8] : memref<1x128xf32, #tpu.memory_space<vmem>>, vector<1x128xf32>
    %11 = vector.broadcast %10 : vector<1x128xf32> to vector<8x128xf32>
    %12 = arith.addf %9, %11 : vector<8x128xf32>
    %13 = vector.broadcast %4 : vector<1x128xf32> to vector<8x128xf32>
    %14 = arith.mulf %12, %13 : vector<8x128xf32>
    %c0_9 = arith.constant 0 : index
    %c0_10 = arith.constant 0 : index
    %c0_11 = arith.constant 0 : index
    %15 = vector.load %arg6[%c0_9, %c0_10, %c0_11] : memref<3x128x256xf32, #tpu.memory_space<vmem>>, vector<1x128x256xf32>
    %16 = vector.shape_cast %15 : vector<1x128x256xf32> to vector<128x256xf32>
    %cst_12 = arith.constant dense<0.000000e+00> : vector<8x256xf32>
    %17 = tpu.matmul %14, %16, %cst_12 {dimension_numbers = #tpu.dot_dimension_numbers<[1], [0], [0], [1], [0, 0, 1, 1], [], []>} : vector<8x128xf32>, vector<128x256xf32>, vector<8x256xf32> -> vector<8x256xf32>
    %c0_13 = arith.constant 0 : index
    %c0_14 = arith.constant 0 : index
    %c0_15 = arith.constant 0 : index
    %18 = vector.load %arg9[%c0_13, %c0_14, %c0_15] : memref<3x1x256xf32, #tpu.memory_space<vmem>>, vector<1x1x256xf32>
    %19 = vector.shape_cast %18 : vector<1x1x256xf32> to vector<1x256xf32>
    %20 = vector.broadcast %19 : vector<1x256xf32> to vector<8x256xf32>
    %21 = arith.addf %17, %20 : vector<8x256xf32>
    %c0_16 = arith.constant 0 : index
    %c0_17 = arith.constant 0 : index
    %c0_18 = arith.constant 0 : index
    %22 = vector.load %arg7[%c0_16, %c0_17, %c0_18] : memref<3x128x256xf32, #tpu.memory_space<vmem>>, vector<1x128x256xf32>
    %23 = vector.shape_cast %22 : vector<1x128x256xf32> to vector<128x256xf32>
    %cst_19 = arith.constant dense<0.000000e+00> : vector<8x256xf32>
    %24 = tpu.matmul %14, %23, %cst_19 {dimension_numbers = #tpu.dot_dimension_numbers<[1], [0], [0], [1], [0, 0, 1, 1], [], []>} : vector<8x128xf32>, vector<128x256xf32>, vector<8x256xf32> -> vector<8x256xf32>
    %c0_20 = arith.constant 0 : index
    %c0_21 = arith.constant 0 : index
    %c0_22 = arith.constant 0 : index
    %25 = vector.load %arg8[%c0_20, %c0_21, %c0_22] : memref<3x128x256xf32, #tpu.memory_space<vmem>>, vector<1x128x256xf32>
    %26 = vector.shape_cast %25 : vector<1x128x256xf32> to vector<128x256xf32>
    %cst_23 = arith.constant dense<0.000000e+00> : vector<32x256xf32>
    %27 = tpu.matmul %5, %26, %cst_23 {dimension_numbers = #tpu.dot_dimension_numbers<[1], [0], [0], [1], [0, 0, 1, 1], [], []>} : vector<32x128xf32>, vector<128x256xf32>, vector<32x256xf32> -> vector<32x256xf32>
    %cst_24 = arith.constant dense<0.000000e+00> : vector<32x256xf32>
    %28 = tpu.matmul %6, %24, %cst_24 {dimension_numbers = #tpu.dot_dimension_numbers<[1], [0], [0], [1], [0, 0, 1, 1], [], []>} : vector<32x8xf32>, vector<8x256xf32>, vector<32x256xf32> -> vector<32x256xf32>
    %29 = arith.addf %28, %27 : vector<32x256xf32>
    %cst_25 = arith.constant 0.000000e+00 : f32
    %30 = vector.broadcast %cst_25 : f32 to vector<8x128xf32>
    %31 = vector.extract_strided_slice %29 {offsets = [0, 0], sizes = [8, 256], strides = [1, 1]} : vector<32x256xf32> to vector<8x256xf32>
    %32 = arith.addf %31, %21 : vector<8x256xf32>
    %33 = vector.extract_strided_slice %32 {offsets = [0, 0], sizes = [8, 128], strides = [1, 1]} : vector<8x256xf32> to vector<8x128xf32>
    %cst_26 = arith.constant 0.000000e+00 : f32
    %34 = vector.broadcast %cst_26 : f32 to vector<8x128xf32>
    %35 = arith.subf %34, %33 : vector<8x128xf32>
    %36 = math.exp %35 : vector<8x128xf32>
    %cst_27 = arith.constant 1.000000e+00 : f32
    %37 = vector.broadcast %cst_27 : f32 to vector<8x128xf32>
    %38 = arith.addf %37, %36 : vector<8x128xf32>
    %39 = tpu.reciprocal %38 {approx = true} : vector<8x128xf32> -> vector<8x128xf32>
    %40 = vector.extract_strided_slice %32 {offsets = [0, 128], sizes = [8, 128], strides = [1, 1]} : vector<8x256xf32> to vector<8x128xf32>
    %cst_28 = arith.constant 0.000000e+00 : f32
    %41 = vector.broadcast %cst_28 : f32 to vector<8x128xf32>
    %42 = arith.maximumf %40, %41 : vector<8x128xf32>
    %43 = math.absf %40 : vector<8x128xf32>
    %cst_29 = arith.constant 0.000000e+00 : f32
    %44 = vector.broadcast %cst_29 : f32 to vector<8x128xf32>
    %45 = arith.subf %44, %43 : vector<8x128xf32>
    %46 = math.exp %45 : vector<8x128xf32>
    %47 = math.log1p %46 : vector<8x128xf32>
    %48 = arith.addf %42, %47 : vector<8x128xf32>
    %49 = arith.mulf %39, %48 : vector<8x128xf32>
    %50 = arith.addf %30, %49 : vector<8x128xf32>
    %51 = vector.extract_strided_slice %29 {offsets = [8, 0], sizes = [8, 256], strides = [1, 1]} : vector<32x256xf32> to vector<8x256xf32>
    %52 = arith.addf %51, %21 : vector<8x256xf32>
    %53 = vector.extract_strided_slice %52 {offsets = [0, 0], sizes = [8, 128], strides = [1, 1]} : vector<8x256xf32> to vector<8x128xf32>
    %cst_30 = arith.constant 0.000000e+00 : f32
    %54 = vector.broadcast %cst_30 : f32 to vector<8x128xf32>
    %55 = arith.subf %54, %53 : vector<8x128xf32>
    %56 = math.exp %55 : vector<8x128xf32>
    %cst_31 = arith.constant 1.000000e+00 : f32
    %57 = vector.broadcast %cst_31 : f32 to vector<8x128xf32>
    %58 = arith.addf %57, %56 : vector<8x128xf32>
    %59 = tpu.reciprocal %58 {approx = true} : vector<8x128xf32> -> vector<8x128xf32>
    %60 = vector.extract_strided_slice %52 {offsets = [0, 128], sizes = [8, 128], strides = [1, 1]} : vector<8x256xf32> to vector<8x128xf32>
    %cst_32 = arith.constant 0.000000e+00 : f32
    %61 = vector.broadcast %cst_32 : f32 to vector<8x128xf32>
    %62 = arith.maximumf %60, %61 : vector<8x128xf32>
    %63 = math.absf %60 : vector<8x128xf32>
    %cst_33 = arith.constant 0.000000e+00 : f32
    %64 = vector.broadcast %cst_33 : f32 to vector<8x128xf32>
    %65 = arith.subf %64, %63 : vector<8x128xf32>
    %66 = math.exp %65 : vector<8x128xf32>
    %67 = math.log1p %66 : vector<8x128xf32>
    %68 = arith.addf %62, %67 : vector<8x128xf32>
    %69 = arith.mulf %59, %68 : vector<8x128xf32>
    %70 = arith.addf %50, %69 : vector<8x128xf32>
    %71 = vector.extract_strided_slice %29 {offsets = [16, 0], sizes = [8, 256], strides = [1, 1]} : vector<32x256xf32> to vector<8x256xf32>
    %72 = arith.addf %71, %21 : vector<8x256xf32>
    %73 = vector.extract_strided_slice %72 {offsets = [0, 0], sizes = [8, 128], strides = [1, 1]} : vector<8x256xf32> to vector<8x128xf32>
    %cst_34 = arith.constant 0.000000e+00 : f32
    %74 = vector.broadcast %cst_34 : f32 to vector<8x128xf32>
    %75 = arith.subf %74, %73 : vector<8x128xf32>
    %76 = math.exp %75 : vector<8x128xf32>
    %cst_35 = arith.constant 1.000000e+00 : f32
    %77 = vector.broadcast %cst_35 : f32 to vector<8x128xf32>
    %78 = arith.addf %77, %76 : vector<8x128xf32>
    %79 = tpu.reciprocal %78 {approx = true} : vector<8x128xf32> -> vector<8x128xf32>
    %80 = vector.extract_strided_slice %72 {offsets = [0, 128], sizes = [8, 128], strides = [1, 1]} : vector<8x256xf32> to vector<8x128xf32>
    %cst_36 = arith.constant 0.000000e+00 : f32
    %81 = vector.broadcast %cst_36 : f32 to vector<8x128xf32>
    %82 = arith.maximumf %80, %81 : vector<8x128xf32>
    %83 = math.absf %80 : vector<8x128xf32>
    %cst_37 = arith.constant 0.000000e+00 : f32
    %84 = vector.broadcast %cst_37 : f32 to vector<8x128xf32>
    %85 = arith.subf %84, %83 : vector<8x128xf32>
    %86 = math.exp %85 : vector<8x128xf32>
    %87 = math.log1p %86 : vector<8x128xf32>
    %88 = arith.addf %82, %87 : vector<8x128xf32>
    %89 = arith.mulf %79, %88 : vector<8x128xf32>
    %90 = arith.addf %70, %89 : vector<8x128xf32>
    %91 = vector.extract_strided_slice %29 {offsets = [24, 0], sizes = [8, 256], strides = [1, 1]} : vector<32x256xf32> to vector<8x256xf32>
    %92 = arith.addf %91, %21 : vector<8x256xf32>
    %93 = vector.extract_strided_slice %92 {offsets = [0, 0], sizes = [8, 128], strides = [1, 1]} : vector<8x256xf32> to vector<8x128xf32>
    %cst_38 = arith.constant 0.000000e+00 : f32
    %94 = vector.broadcast %cst_38 : f32 to vector<8x128xf32>
    %95 = arith.subf %94, %93 : vector<8x128xf32>
    %96 = math.exp %95 : vector<8x128xf32>
    %cst_39 = arith.constant 1.000000e+00 : f32
    %97 = vector.broadcast %cst_39 : f32 to vector<8x128xf32>
    %98 = arith.addf %97, %96 : vector<8x128xf32>
    %99 = tpu.reciprocal %98 {approx = true} : vector<8x128xf32> -> vector<8x128xf32>
    %100 = vector.extract_strided_slice %92 {offsets = [0, 128], sizes = [8, 128], strides = [1, 1]} : vector<8x256xf32> to vector<8x128xf32>
    %cst_40 = arith.constant 0.000000e+00 : f32
    %101 = vector.broadcast %cst_40 : f32 to vector<8x128xf32>
    %102 = arith.maximumf %100, %101 : vector<8x128xf32>
    %103 = math.absf %100 : vector<8x128xf32>
    %cst_41 = arith.constant 0.000000e+00 : f32
    %104 = vector.broadcast %cst_41 : f32 to vector<8x128xf32>
    %105 = arith.subf %104, %103 : vector<8x128xf32>
    %106 = math.exp %105 : vector<8x128xf32>
    %107 = math.log1p %106 : vector<8x128xf32>
    %108 = arith.addf %102, %107 : vector<8x128xf32>
    %109 = arith.mulf %99, %108 : vector<8x128xf32>
    %110 = arith.addf %90, %109 : vector<8x128xf32>
    %c0_42 = arith.constant 0 : index
    %c0_43 = arith.constant 0 : index
    %c0_44 = arith.constant 0 : index
    %111 = vector.load %arg10[%c0_42, %c0_43, %c0_44] : memref<3x1x128xf32, #tpu.memory_space<vmem>>, vector<1x1x128xf32>
    %112 = vector.shape_cast %111 : vector<1x1x128xf32> to vector<1x128xf32>
    %113 = vector.broadcast %112 : vector<1x128xf32> to vector<8x128xf32>
    %114 = arith.mulf %110, %113 : vector<8x128xf32>
    %c0_45 = arith.constant 0 : index
    %c0_46 = arith.constant 0 : index
    %c0_47 = arith.constant 0 : index
    %115 = vector.load %arg11[%c0_45, %c0_46, %c0_47] : memref<3x1x128xf32, #tpu.memory_space<vmem>>, vector<1x1x128xf32>
    %116 = vector.shape_cast %115 : vector<1x1x128xf32> to vector<1x128xf32>
    %117 = vector.broadcast %116 : vector<1x128xf32> to vector<8x128xf32>
    %118 = arith.addf %114, %117 : vector<8x128xf32>
    %119 = arith.addf %14, %118 : vector<8x128xf32>
    %cst_48 = arith.constant 0.000000e+00 : f32
    %120 = vector.broadcast %cst_48 : f32 to vector<8x128xf32>
    %121 = arith.maximumf %119, %120 : vector<8x128xf32>
    %122 = math.absf %119 : vector<8x128xf32>
    %cst_49 = arith.constant 0.000000e+00 : f32
    %123 = vector.broadcast %cst_49 : f32 to vector<8x128xf32>
    %124 = arith.subf %123, %122 : vector<8x128xf32>
    %125 = math.exp %124 : vector<8x128xf32>
    %126 = math.log1p %125 : vector<8x128xf32>
    %127 = arith.addf %121, %126 : vector<8x128xf32>
    %128 = vector.broadcast %4 : vector<1x128xf32> to vector<8x128xf32>
    %129 = arith.mulf %127, %128 : vector<8x128xf32>
    %c1 = arith.constant 1 : index
    %c0_50 = arith.constant 0 : index
    %c0_51 = arith.constant 0 : index
    %130 = vector.load %arg6[%c1, %c0_50, %c0_51] : memref<3x128x256xf32, #tpu.memory_space<vmem>>, vector<1x128x256xf32>
    %131 = vector.shape_cast %130 : vector<1x128x256xf32> to vector<128x256xf32>
    %cst_52 = arith.constant dense<0.000000e+00> : vector<8x256xf32>
    %132 = tpu.matmul %129, %131, %cst_52 {dimension_numbers = #tpu.dot_dimension_numbers<[1], [0], [0], [1], [0, 0, 1, 1], [], []>} : vector<8x128xf32>, vector<128x256xf32>, vector<8x256xf32> -> vector<8x256xf32>
    %c1_53 = arith.constant 1 : index
    %c0_54 = arith.constant 0 : index
    %c0_55 = arith.constant 0 : index
    %133 = vector.load %arg9[%c1_53, %c0_54, %c0_55] : memref<3x1x256xf32, #tpu.memory_space<vmem>>, vector<1x1x256xf32>
    %134 = vector.shape_cast %133 : vector<1x1x256xf32> to vector<1x256xf32>
    %135 = vector.broadcast %134 : vector<1x256xf32> to vector<8x256xf32>
    %136 = arith.addf %132, %135 : vector<8x256xf32>
    %c1_56 = arith.constant 1 : index
    %c0_57 = arith.constant 0 : index
    %c0_58 = arith.constant 0 : index
    %137 = vector.load %arg7[%c1_56, %c0_57, %c0_58] : memref<3x128x256xf32, #tpu.memory_space<vmem>>, vector<1x128x256xf32>
    %138 = vector.shape_cast %137 : vector<1x128x256xf32> to vector<128x256xf32>
    %cst_59 = arith.constant dense<0.000000e+00> : vector<8x256xf32>
    %139 = tpu.matmul %129, %138, %cst_59 {dimension_numbers = #tpu.dot_dimension_numbers<[1], [0], [0], [1], [0, 0, 1, 1], [], []>} : vector<8x128xf32>, vector<128x256xf32>, vector<8x256xf32> -> vector<8x256xf32>
    %c1_60 = arith.constant 1 : index
    %c0_61 = arith.constant 0 : index
    %c0_62 = arith.constant 0 : index
    %140 = vector.load %arg8[%c1_60, %c0_61, %c0_62] : memref<3x128x256xf32, #tpu.memory_space<vmem>>, vector<1x128x256xf32>
    %141 = vector.shape_cast %140 : vector<1x128x256xf32> to vector<128x256xf32>
    %cst_63 = arith.constant dense<0.000000e+00> : vector<32x256xf32>
    %142 = tpu.matmul %5, %141, %cst_63 {dimension_numbers = #tpu.dot_dimension_numbers<[1], [0], [0], [1], [0, 0, 1, 1], [], []>} : vector<32x128xf32>, vector<128x256xf32>, vector<32x256xf32> -> vector<32x256xf32>
    %cst_64 = arith.constant dense<0.000000e+00> : vector<32x256xf32>
    %143 = tpu.matmul %6, %139, %cst_64 {dimension_numbers = #tpu.dot_dimension_numbers<[1], [0], [0], [1], [0, 0, 1, 1], [], []>} : vector<32x8xf32>, vector<8x256xf32>, vector<32x256xf32> -> vector<32x256xf32>
    %144 = arith.addf %143, %142 : vector<32x256xf32>
    %cst_65 = arith.constant 0.000000e+00 : f32
    %145 = vector.broadcast %cst_65 : f32 to vector<8x128xf32>
    %146 = vector.extract_strided_slice %144 {offsets = [0, 0], sizes = [8, 256], strides = [1, 1]} : vector<32x256xf32> to vector<8x256xf32>
    %147 = arith.addf %146, %136 : vector<8x256xf32>
    %148 = vector.extract_strided_slice %147 {offsets = [0, 0], sizes = [8, 128], strides = [1, 1]} : vector<8x256xf32> to vector<8x128xf32>
    %cst_66 = arith.constant 0.000000e+00 : f32
    %149 = vector.broadcast %cst_66 : f32 to vector<8x128xf32>
    %150 = arith.subf %149, %148 : vector<8x128xf32>
    %151 = math.exp %150 : vector<8x128xf32>
    %cst_67 = arith.constant 1.000000e+00 : f32
    %152 = vector.broadcast %cst_67 : f32 to vector<8x128xf32>
    %153 = arith.addf %152, %151 : vector<8x128xf32>
    %154 = tpu.reciprocal %153 {approx = true} : vector<8x128xf32> -> vector<8x128xf32>
    %155 = vector.extract_strided_slice %147 {offsets = [0, 128], sizes = [8, 128], strides = [1, 1]} : vector<8x256xf32> to vector<8x128xf32>
    %cst_68 = arith.constant 0.000000e+00 : f32
    %156 = vector.broadcast %cst_68 : f32 to vector<8x128xf32>
    %157 = arith.maximumf %155, %156 : vector<8x128xf32>
    %158 = math.absf %155 : vector<8x128xf32>
    %cst_69 = arith.constant 0.000000e+00 : f32
    %159 = vector.broadcast %cst_69 : f32 to vector<8x128xf32>
    %160 = arith.subf %159, %158 : vector<8x128xf32>
    %161 = math.exp %160 : vector<8x128xf32>
    %162 = math.log1p %161 : vector<8x128xf32>
    %163 = arith.addf %157, %162 : vector<8x128xf32>
    %164 = arith.mulf %154, %163 : vector<8x128xf32>
    %165 = arith.addf %145, %164 : vector<8x128xf32>
    %166 = vector.extract_strided_slice %144 {offsets = [8, 0], sizes = [8, 256], strides = [1, 1]} : vector<32x256xf32> to vector<8x256xf32>
    %167 = arith.addf %166, %136 : vector<8x256xf32>
    %168 = vector.extract_strided_slice %167 {offsets = [0, 0], sizes = [8, 128], strides = [1, 1]} : vector<8x256xf32> to vector<8x128xf32>
    %cst_70 = arith.constant 0.000000e+00 : f32
    %169 = vector.broadcast %cst_70 : f32 to vector<8x128xf32>
    %170 = arith.subf %169, %168 : vector<8x128xf32>
    %171 = math.exp %170 : vector<8x128xf32>
    %cst_71 = arith.constant 1.000000e+00 : f32
    %172 = vector.broadcast %cst_71 : f32 to vector<8x128xf32>
    %173 = arith.addf %172, %171 : vector<8x128xf32>
    %174 = tpu.reciprocal %173 {approx = true} : vector<8x128xf32> -> vector<8x128xf32>
    %175 = vector.extract_strided_slice %167 {offsets = [0, 128], sizes = [8, 128], strides = [1, 1]} : vector<8x256xf32> to vector<8x128xf32>
    %cst_72 = arith.constant 0.000000e+00 : f32
    %176 = vector.broadcast %cst_72 : f32 to vector<8x128xf32>
    %177 = arith.maximumf %175, %176 : vector<8x128xf32>
    %178 = math.absf %175 : vector<8x128xf32>
    %cst_73 = arith.constant 0.000000e+00 : f32
    %179 = vector.broadcast %cst_73 : f32 to vector<8x128xf32>
    %180 = arith.subf %179, %178 : vector<8x128xf32>
    %181 = math.exp %180 : vector<8x128xf32>
    %182 = math.log1p %181 : vector<8x128xf32>
    %183 = arith.addf %177, %182 : vector<8x128xf32>
    %184 = arith.mulf %174, %183 : vector<8x128xf32>
    %185 = arith.addf %165, %184 : vector<8x128xf32>
    %186 = vector.extract_strided_slice %144 {offsets = [16, 0], sizes = [8, 256], strides = [1, 1]} : vector<32x256xf32> to vector<8x256xf32>
    %187 = arith.addf %186, %136 : vector<8x256xf32>
    %188 = vector.extract_strided_slice %187 {offsets = [0, 0], sizes = [8, 128], strides = [1, 1]} : vector<8x256xf32> to vector<8x128xf32>
    %cst_74 = arith.constant 0.000000e+00 : f32
    %189 = vector.broadcast %cst_74 : f32 to vector<8x128xf32>
    %190 = arith.subf %189, %188 : vector<8x128xf32>
    %191 = math.exp %190 : vector<8x128xf32>
    %cst_75 = arith.constant 1.000000e+00 : f32
    %192 = vector.broadcast %cst_75 : f32 to vector<8x128xf32>
    %193 = arith.addf %192, %191 : vector<8x128xf32>
    %194 = tpu.reciprocal %193 {approx = true} : vector<8x128xf32> -> vector<8x128xf32>
    %195 = vector.extract_strided_slice %187 {offsets = [0, 128], sizes = [8, 128], strides = [1, 1]} : vector<8x256xf32> to vector<8x128xf32>
    %cst_76 = arith.constant 0.000000e+00 : f32
    %196 = vector.broadcast %cst_76 : f32 to vector<8x128xf32>
    %197 = arith.maximumf %195, %196 : vector<8x128xf32>
    %198 = math.absf %195 : vector<8x128xf32>
    %cst_77 = arith.constant 0.000000e+00 : f32
    %199 = vector.broadcast %cst_77 : f32 to vector<8x128xf32>
    %200 = arith.subf %199, %198 : vector<8x128xf32>
    %201 = math.exp %200 : vector<8x128xf32>
    %202 = math.log1p %201 : vector<8x128xf32>
    %203 = arith.addf %197, %202 : vector<8x128xf32>
    %204 = arith.mulf %194, %203 : vector<8x128xf32>
    %205 = arith.addf %185, %204 : vector<8x128xf32>
    %206 = vector.extract_strided_slice %144 {offsets = [24, 0], sizes = [8, 256], strides = [1, 1]} : vector<32x256xf32> to vector<8x256xf32>
    %207 = arith.addf %206, %136 : vector<8x256xf32>
    %208 = vector.extract_strided_slice %207 {offsets = [0, 0], sizes = [8, 128], strides = [1, 1]} : vector<8x256xf32> to vector<8x128xf32>
    %cst_78 = arith.constant 0.000000e+00 : f32
    %209 = vector.broadcast %cst_78 : f32 to vector<8x128xf32>
    %210 = arith.subf %209, %208 : vector<8x128xf32>
    %211 = math.exp %210 : vector<8x128xf32>
    %cst_79 = arith.constant 1.000000e+00 : f32
    %212 = vector.broadcast %cst_79 : f32 to vector<8x128xf32>
    %213 = arith.addf %212, %211 : vector<8x128xf32>
    %214 = tpu.reciprocal %213 {approx = true} : vector<8x128xf32> -> vector<8x128xf32>
    %215 = vector.extract_strided_slice %207 {offsets = [0, 128], sizes = [8, 128], strides = [1, 1]} : vector<8x256xf32> to vector<8x128xf32>
    %cst_80 = arith.constant 0.000000e+00 : f32
    %216 = vector.broadcast %cst_80 : f32 to vector<8x128xf32>
    %217 = arith.maximumf %215, %216 : vector<8x128xf32>
    %218 = math.absf %215 : vector<8x128xf32>
    %cst_81 = arith.constant 0.000000e+00 : f32
    %219 = vector.broadcast %cst_81 : f32 to vector<8x128xf32>
    %220 = arith.subf %219, %218 : vector<8x128xf32>
    %221 = math.exp %220 : vector<8x128xf32>
    %222 = math.log1p %221 : vector<8x128xf32>
    %223 = arith.addf %217, %222 : vector<8x128xf32>
    %224 = arith.mulf %214, %223 : vector<8x128xf32>
    %225 = arith.addf %205, %224 : vector<8x128xf32>
    %c1_82 = arith.constant 1 : index
    %c0_83 = arith.constant 0 : index
    %c0_84 = arith.constant 0 : index
    %226 = vector.load %arg10[%c1_82, %c0_83, %c0_84] : memref<3x1x128xf32, #tpu.memory_space<vmem>>, vector<1x1x128xf32>
    %227 = vector.shape_cast %226 : vector<1x1x128xf32> to vector<1x128xf32>
    %228 = vector.broadcast %227 : vector<1x128xf32> to vector<8x128xf32>
    %229 = arith.mulf %225, %228 : vector<8x128xf32>
    %c1_85 = arith.constant 1 : index
    %c0_86 = arith.constant 0 : index
    %c0_87 = arith.constant 0 : index
    %230 = vector.load %arg11[%c1_85, %c0_86, %c0_87] : memref<3x1x128xf32, #tpu.memory_space<vmem>>, vector<1x1x128xf32>
    %231 = vector.shape_cast %230 : vector<1x1x128xf32> to vector<1x128xf32>
    %232 = vector.broadcast %231 : vector<1x128xf32> to vector<8x128xf32>
    %233 = arith.addf %229, %232 : vector<8x128xf32>
    %234 = arith.addf %129, %233 : vector<8x128xf32>
    %cst_88 = arith.constant 0.000000e+00 : f32
    %235 = vector.broadcast %cst_88 : f32 to vector<8x128xf32>
    %236 = arith.maximumf %234, %235 : vector<8x128xf32>
    %237 = math.absf %234 : vector<8x128xf32>
    %cst_89 = arith.constant 0.000000e+00 : f32
    %238 = vector.broadcast %cst_89 : f32 to vector<8x128xf32>
    %239 = arith.subf %238, %237 : vector<8x128xf32>
    %240 = math.exp %239 : vector<8x128xf32>
    %241 = math.log1p %240 : vector<8x128xf32>
    %242 = arith.addf %236, %241 : vector<8x128xf32>
    %243 = vector.broadcast %4 : vector<1x128xf32> to vector<8x128xf32>
    %244 = arith.mulf %242, %243 : vector<8x128xf32>
    %c2 = arith.constant 2 : index
    %c0_90 = arith.constant 0 : index
    %c0_91 = arith.constant 0 : index
    %245 = vector.load %arg6[%c2, %c0_90, %c0_91] : memref<3x128x256xf32, #tpu.memory_space<vmem>>, vector<1x128x256xf32>
    %246 = vector.shape_cast %245 : vector<1x128x256xf32> to vector<128x256xf32>
    %cst_92 = arith.constant dense<0.000000e+00> : vector<8x256xf32>
    %247 = tpu.matmul %244, %246, %cst_92 {dimension_numbers = #tpu.dot_dimension_numbers<[1], [0], [0], [1], [0, 0, 1, 1], [], []>} : vector<8x128xf32>, vector<128x256xf32>, vector<8x256xf32> -> vector<8x256xf32>
    %c2_93 = arith.constant 2 : index
    %c0_94 = arith.constant 0 : index
    %c0_95 = arith.constant 0 : index
    %248 = vector.load %arg9[%c2_93, %c0_94, %c0_95] : memref<3x1x256xf32, #tpu.memory_space<vmem>>, vector<1x1x256xf32>
    %249 = vector.shape_cast %248 : vector<1x1x256xf32> to vector<1x256xf32>
    %250 = vector.broadcast %249 : vector<1x256xf32> to vector<8x256xf32>
    %251 = arith.addf %247, %250 : vector<8x256xf32>
    %c2_96 = arith.constant 2 : index
    %c0_97 = arith.constant 0 : index
    %c0_98 = arith.constant 0 : index
    %252 = vector.load %arg7[%c2_96, %c0_97, %c0_98] : memref<3x128x256xf32, #tpu.memory_space<vmem>>, vector<1x128x256xf32>
    %253 = vector.shape_cast %252 : vector<1x128x256xf32> to vector<128x256xf32>
    %cst_99 = arith.constant dense<0.000000e+00> : vector<8x256xf32>
    %254 = tpu.matmul %244, %253, %cst_99 {dimension_numbers = #tpu.dot_dimension_numbers<[1], [0], [0], [1], [0, 0, 1, 1], [], []>} : vector<8x128xf32>, vector<128x256xf32>, vector<8x256xf32> -> vector<8x256xf32>
    %c2_100 = arith.constant 2 : index
    %c0_101 = arith.constant 0 : index
    %c0_102 = arith.constant 0 : index
    %255 = vector.load %arg8[%c2_100, %c0_101, %c0_102] : memref<3x128x256xf32, #tpu.memory_space<vmem>>, vector<1x128x256xf32>
    %256 = vector.shape_cast %255 : vector<1x128x256xf32> to vector<128x256xf32>
    %cst_103 = arith.constant dense<0.000000e+00> : vector<32x256xf32>
    %257 = tpu.matmul %5, %256, %cst_103 {dimension_numbers = #tpu.dot_dimension_numbers<[1], [0], [0], [1], [0, 0, 1, 1], [], []>} : vector<32x128xf32>, vector<128x256xf32>, vector<32x256xf32> -> vector<32x256xf32>
    %cst_104 = arith.constant dense<0.000000e+00> : vector<32x256xf32>
    %258 = tpu.matmul %6, %254, %cst_104 {dimension_numbers = #tpu.dot_dimension_numbers<[1], [0], [0], [1], [0, 0, 1, 1], [], []>} : vector<32x8xf32>, vector<8x256xf32>, vector<32x256xf32> -> vector<32x256xf32>
    %259 = arith.addf %258, %257 : vector<32x256xf32>
    %cst_105 = arith.constant 0.000000e+00 : f32
    %260 = vector.broadcast %cst_105 : f32 to vector<8x128xf32>
    %261 = vector.extract_strided_slice %259 {offsets = [0, 0], sizes = [8, 256], strides = [1, 1]} : vector<32x256xf32> to vector<8x256xf32>
    %262 = arith.addf %261, %251 : vector<8x256xf32>
    %263 = vector.extract_strided_slice %262 {offsets = [0, 0], sizes = [8, 128], strides = [1, 1]} : vector<8x256xf32> to vector<8x128xf32>
    %cst_106 = arith.constant 0.000000e+00 : f32
    %264 = vector.broadcast %cst_106 : f32 to vector<8x128xf32>
    %265 = arith.subf %264, %263 : vector<8x128xf32>
    %266 = math.exp %265 : vector<8x128xf32>
    %cst_107 = arith.constant 1.000000e+00 : f32
    %267 = vector.broadcast %cst_107 : f32 to vector<8x128xf32>
    %268 = arith.addf %267, %266 : vector<8x128xf32>
    %269 = tpu.reciprocal %268 {approx = true} : vector<8x128xf32> -> vector<8x128xf32>
    %270 = vector.extract_strided_slice %262 {offsets = [0, 128], sizes = [8, 128], strides = [1, 1]} : vector<8x256xf32> to vector<8x128xf32>
    %cst_108 = arith.constant 0.000000e+00 : f32
    %271 = vector.broadcast %cst_108 : f32 to vector<8x128xf32>
    %272 = arith.maximumf %270, %271 : vector<8x128xf32>
    %273 = math.absf %270 : vector<8x128xf32>
    %cst_109 = arith.constant 0.000000e+00 : f32
    %274 = vector.broadcast %cst_109 : f32 to vector<8x128xf32>
    %275 = arith.subf %274, %273 : vector<8x128xf32>
    %276 = math.exp %275 : vector<8x128xf32>
    %277 = math.log1p %276 : vector<8x128xf32>
    %278 = arith.addf %272, %277 : vector<8x128xf32>
    %279 = arith.mulf %269, %278 : vector<8x128xf32>
    %280 = arith.addf %260, %279 : vector<8x128xf32>
    %281 = vector.extract_strided_slice %259 {offsets = [8, 0], sizes = [8, 256], strides = [1, 1]} : vector<32x256xf32> to vector<8x256xf32>
    %282 = arith.addf %281, %251 : vector<8x256xf32>
    %283 = vector.extract_strided_slice %282 {offsets = [0, 0], sizes = [8, 128], strides = [1, 1]} : vector<8x256xf32> to vector<8x128xf32>
    %cst_110 = arith.constant 0.000000e+00 : f32
    %284 = vector.broadcast %cst_110 : f32 to vector<8x128xf32>
    %285 = arith.subf %284, %283 : vector<8x128xf32>
    %286 = math.exp %285 : vector<8x128xf32>
    %cst_111 = arith.constant 1.000000e+00 : f32
    %287 = vector.broadcast %cst_111 : f32 to vector<8x128xf32>
    %288 = arith.addf %287, %286 : vector<8x128xf32>
    %289 = tpu.reciprocal %288 {approx = true} : vector<8x128xf32> -> vector<8x128xf32>
    %290 = vector.extract_strided_slice %282 {offsets = [0, 128], sizes = [8, 128], strides = [1, 1]} : vector<8x256xf32> to vector<8x128xf32>
    %cst_112 = arith.constant 0.000000e+00 : f32
    %291 = vector.broadcast %cst_112 : f32 to vector<8x128xf32>
    %292 = arith.maximumf %290, %291 : vector<8x128xf32>
    %293 = math.absf %290 : vector<8x128xf32>
    %cst_113 = arith.constant 0.000000e+00 : f32
    %294 = vector.broadcast %cst_113 : f32 to vector<8x128xf32>
    %295 = arith.subf %294, %293 : vector<8x128xf32>
    %296 = math.exp %295 : vector<8x128xf32>
    %297 = math.log1p %296 : vector<8x128xf32>
    %298 = arith.addf %292, %297 : vector<8x128xf32>
    %299 = arith.mulf %289, %298 : vector<8x128xf32>
    %300 = arith.addf %280, %299 : vector<8x128xf32>
    %301 = vector.extract_strided_slice %259 {offsets = [16, 0], sizes = [8, 256], strides = [1, 1]} : vector<32x256xf32> to vector<8x256xf32>
    %302 = arith.addf %301, %251 : vector<8x256xf32>
    %303 = vector.extract_strided_slice %302 {offsets = [0, 0], sizes = [8, 128], strides = [1, 1]} : vector<8x256xf32> to vector<8x128xf32>
    %cst_114 = arith.constant 0.000000e+00 : f32
    %304 = vector.broadcast %cst_114 : f32 to vector<8x128xf32>
    %305 = arith.subf %304, %303 : vector<8x128xf32>
    %306 = math.exp %305 : vector<8x128xf32>
    %cst_115 = arith.constant 1.000000e+00 : f32
    %307 = vector.broadcast %cst_115 : f32 to vector<8x128xf32>
    %308 = arith.addf %307, %306 : vector<8x128xf32>
    %309 = tpu.reciprocal %308 {approx = true} : vector<8x128xf32> -> vector<8x128xf32>
    %310 = vector.extract_strided_slice %302 {offsets = [0, 128], sizes = [8, 128], strides = [1, 1]} : vector<8x256xf32> to vector<8x128xf32>
    %cst_116 = arith.constant 0.000000e+00 : f32
    %311 = vector.broadcast %cst_116 : f32 to vector<8x128xf32>
    %312 = arith.maximumf %310, %311 : vector<8x128xf32>
    %313 = math.absf %310 : vector<8x128xf32>
    %cst_117 = arith.constant 0.000000e+00 : f32
    %314 = vector.broadcast %cst_117 : f32 to vector<8x128xf32>
    %315 = arith.subf %314, %313 : vector<8x128xf32>
    %316 = math.exp %315 : vector<8x128xf32>
    %317 = math.log1p %316 : vector<8x128xf32>
    %318 = arith.addf %312, %317 : vector<8x128xf32>
    %319 = arith.mulf %309, %318 : vector<8x128xf32>
    %320 = arith.addf %300, %319 : vector<8x128xf32>
    %321 = vector.extract_strided_slice %259 {offsets = [24, 0], sizes = [8, 256], strides = [1, 1]} : vector<32x256xf32> to vector<8x256xf32>
    %322 = arith.addf %321, %251 : vector<8x256xf32>
    %323 = vector.extract_strided_slice %322 {offsets = [0, 0], sizes = [8, 128], strides = [1, 1]} : vector<8x256xf32> to vector<8x128xf32>
    %cst_118 = arith.constant 0.000000e+00 : f32
    %324 = vector.broadcast %cst_118 : f32 to vector<8x128xf32>
    %325 = arith.subf %324, %323 : vector<8x128xf32>
    %326 = math.exp %325 : vector<8x128xf32>
    %cst_119 = arith.constant 1.000000e+00 : f32
    %327 = vector.broadcast %cst_119 : f32 to vector<8x128xf32>
    %328 = arith.addf %327, %326 : vector<8x128xf32>
    %329 = tpu.reciprocal %328 {approx = true} : vector<8x128xf32> -> vector<8x128xf32>
    %330 = vector.extract_strided_slice %322 {offsets = [0, 128], sizes = [8, 128], strides = [1, 1]} : vector<8x256xf32> to vector<8x128xf32>
    %cst_120 = arith.constant 0.000000e+00 : f32
    %331 = vector.broadcast %cst_120 : f32 to vector<8x128xf32>
    %332 = arith.maximumf %330, %331 : vector<8x128xf32>
    %333 = math.absf %330 : vector<8x128xf32>
    %cst_121 = arith.constant 0.000000e+00 : f32
    %334 = vector.broadcast %cst_121 : f32 to vector<8x128xf32>
    %335 = arith.subf %334, %333 : vector<8x128xf32>
    %336 = math.exp %335 : vector<8x128xf32>
    %337 = math.log1p %336 : vector<8x128xf32>
    %338 = arith.addf %332, %337 : vector<8x128xf32>
    %339 = arith.mulf %329, %338 : vector<8x128xf32>
    %340 = arith.addf %320, %339 : vector<8x128xf32>
    %c2_122 = arith.constant 2 : index
    %c0_123 = arith.constant 0 : index
    %c0_124 = arith.constant 0 : index
    %341 = vector.load %arg10[%c2_122, %c0_123, %c0_124] : memref<3x1x128xf32, #tpu.memory_space<vmem>>, vector<1x1x128xf32>
    %342 = vector.shape_cast %341 : vector<1x1x128xf32> to vector<1x128xf32>
    %343 = vector.broadcast %342 : vector<1x128xf32> to vector<8x128xf32>
    %344 = arith.mulf %340, %343 : vector<8x128xf32>
    %c2_125 = arith.constant 2 : index
    %c0_126 = arith.constant 0 : index
    %c0_127 = arith.constant 0 : index
    %345 = vector.load %arg11[%c2_125, %c0_126, %c0_127] : memref<3x1x128xf32, #tpu.memory_space<vmem>>, vector<1x1x128xf32>
    %346 = vector.shape_cast %345 : vector<1x1x128xf32> to vector<1x128xf32>
    %347 = vector.broadcast %346 : vector<1x128xf32> to vector<8x128xf32>
    %348 = arith.addf %344, %347 : vector<8x128xf32>
    %349 = arith.addf %244, %348 : vector<8x128xf32>
    %cst_128 = arith.constant 0.000000e+00 : f32
    %350 = vector.broadcast %cst_128 : f32 to vector<8x128xf32>
    %351 = arith.maximumf %349, %350 : vector<8x128xf32>
    %352 = math.absf %349 : vector<8x128xf32>
    %cst_129 = arith.constant 0.000000e+00 : f32
    %353 = vector.broadcast %cst_129 : f32 to vector<8x128xf32>
    %354 = arith.subf %353, %352 : vector<8x128xf32>
    %355 = math.exp %354 : vector<8x128xf32>
    %356 = math.log1p %355 : vector<8x128xf32>
    %357 = arith.addf %351, %356 : vector<8x128xf32>
    %358 = vector.broadcast %4 : vector<1x128xf32> to vector<8x128xf32>
    %359 = arith.mulf %357, %358 : vector<8x128xf32>
    %c0_130 = arith.constant 0 : index
    %c0_131 = arith.constant 0 : index
    %360 = vector.load %arg3[%c0_130, %c0_131] : memref<2x8xf32, #tpu.memory_space<vmem>>, vector<2x8xf32>
    %cst_132 = arith.constant dense<0.000000e+00> : vector<2x128xf32>
    %361 = tpu.matmul %360, %359, %cst_132 {dimension_numbers = #tpu.dot_dimension_numbers<[1], [0], [0], [1], [0, 0, 1, 1], [], []>} : vector<2x8xf32>, vector<8x128xf32>, vector<2x128xf32> -> vector<2x128xf32>
    %c0_133 = arith.constant 0 : index
    %c0_134 = arith.constant 0 : index
    %362 = vector.load %arg12[%c0_133, %c0_134] : memref<2x128xf32, #tpu.memory_space<vmem>>, vector<2x128xf32>
    tpu.vector_store %arg12[%c0_133, %c0_134], %361 {strides = array<i32>} : memref<2x128xf32, #tpu.memory_space<vmem>>, vector<2x128xf32>,
    return
  }
}

</mosaic_0001>

<llo_original>
// kernel: tpu_custom_call.1
$region0: #{tpu_custom_call.1}
  #allocation0 [shape = 'u32[]', space=smem, size = 0x4, offset = 0x4, fixed_abs, tag = 'smem constant byte address 0x4 - core index']
  #allocation1 [shape = 'u32[72,128]{1,0:T(1,128)}', space=vmem, size = 0x9000, scoped, tag = 'internal scratch']
  %s0 = inlined_call_operand.vmem [shape: f32[8,128], index: 0, kind: input, shape index: {}]
  %s1 = inlined_call_operand.vmem [shape: f32[32,128], index: 1, kind: input, shape index: {}]
  %s2 = inlined_call_operand.vmem [shape: f32[32,8], index: 2, kind: input, shape index: {}]
  %s3 = inlined_call_operand.hbm [shape: f32[2,8], index: 3, kind: input, shape index: {}]
  %s4 = inlined_call_operand.hbm [shape: f32[128,128], index: 4, kind: input, shape index: {}]
  %s5 = inlined_call_operand.hbm [shape: f32[1,128], index: 5, kind: input, shape index: {}]
  %s6 = inlined_call_operand.hbm [shape: f32[3,128,256], index: 6, kind: input, shape index: {}]
  %s7 = inlined_call_operand.hbm [shape: f32[3,128,256], index: 7, kind: input, shape index: {}]
  %s8 = inlined_call_operand.hbm [shape: f32[3,128,256], index: 8, kind: input, shape index: {}]
  %s9 = inlined_call_operand.vmem [shape: f32[3,1,256], index: 9, kind: input, shape index: {}]
  %s10 = inlined_call_operand.vmem [shape: f32[3,1,128], index: 10, kind: input, shape index: {}]
  %s11 = inlined_call_operand.hbm [shape: f32[3,1,128], index: 11, kind: input, shape index: {}]
  %s12 = inlined_call_operand.hbm [shape: f32[2,128], index: 12, kind: output, shape index: {}]
  %s13 = sld [smem:[#allocation0]]
  $region86: #{tpu_custom_call.1} parent=0
    _
  %s15 = ssub.s32 1, %s13
  %s16 = scalar_select 0, %s15, %s13
  $region1: #{tpu_custom_call.1} parent=0
    #allocation2 [shape = 'u8[1024]{0}', space=vmem, size = 0x400, scoped, tag = 'input window, operand 3, single buffered']
    #allocation3 [shape = 's32[1]{0}', space=sflag, size = 0x4, scoped, tag = 'scoped memory for tpu_custom_call.1']
    #allocation4 [shape = 's32[1]{0}', space=sflag, size = 0x4, scoped, tag = 'scoped memory for tpu_custom_call.1']
    #allocation5 [shape = 'u8[65536]{0}', space=vmem, size = 0x10000, scoped, tag = 'input window, operand 4, single buffered']
    #allocation6 [shape = 's32[1]{0}', space=sflag, size = 0x4, scoped, tag = 'scoped memory for tpu_custom_call.1']
    #allocation7 [shape = 'u8[512]{0}', space=vmem, size = 0x400, scoped, tag = 'input window, operand 5, single buffered']
    #allocation8 [shape = 'u8[393216]{0}', space=vmem, size = 0x60000, scoped, tag = 'input window, operand 6, single buffered']
    #allocation9 [shape = 's32[1]{0}', space=sflag, size = 0x4, scoped, tag = 'scoped memory for tpu_custom_call.1']
    #allocation10 [shape = 'u8[393216]{0}', space=vmem, size = 0x60000, scoped, tag = 'input window, operand 7, single buffered']
    #allocation11 [shape = 'u8[393216]{0}', space=vmem, size = 0x60000, scoped, tag = 'input window, operand 8, single buffered']
    #allocation12 [shape = 's32[1]{0}', space=sflag, size = 0x4, scoped, tag = 'scoped memory for tpu_custom_call.1']
    #allocation13 [shape = 'u8[1536]{0}', space=vmem, size = 0x800, scoped, tag = 'input window, operand 11, single buffered']
    #allocation14 [shape = 'u8[1024]{0}', space=vmem, size = 0x400, scoped, tag = 'output window, operand 0, single buffered']
    %17 = vsyncpa [#allocation3], 0
    %18 = vsyncpa [#allocation6], 0
    %19 = vsyncpa [#allocation9], 0
    %20 = vsyncpa [#allocation12], 0
    %21 = vsyncpa [#allocation4], 0
    // Predicated region
    $region2: #{tpu_custom_call.1} parent=1 // pred_check
      _
    $region3: #{tpu_custom_call.1} parent=1 // pred_check_branch
      %23 = sbr.rel (0) target = $region5
    $region4: #{tpu_custom_call.1} parent=1 // pred_region
      _
    $region5: #{tpu_custom_call.1} parent=1 // pred_fallthru
      _
    // Predicated region
    $region6: #{tpu_custom_call.1} parent=1 // pred_check
      _
    $region7: #{tpu_custom_call.1} parent=1 // pred_check_branch
      %25 = sbr.rel (0) target = $region9
    $region8: #{tpu_custom_call.1} parent=1 // pred_region
      _
    $region9: #{tpu_custom_call.1} parent=1 // pred_fallthru
      _
    // Predicated region
    $region10: #{tpu_custom_call.1} parent=1 // pred_check
      _
    $region11: #{tpu_custom_call.1} parent=1 // pred_check_branch
      %27 = sbr.rel (0) target = $region13
    $region12: #{tpu_custom_call.1} parent=1 // pred_region
      _
    $region13: #{tpu_custom_call.1} parent=1 // pred_fallthru
      _
    // Predicated region
    $region14: #{tpu_custom_call.1} parent=1 // pred_check
      _
    $region15: #{tpu_custom_call.1} parent=1 // pred_check_branch
      %29 = sbr.rel (0) target = $region17
    $region16: #{tpu_custom_call.1} parent=1 // pred_region
      %31 = vsyncadd [#allocation3], 0
      %s33 = sshll.u32 %s3, 4
      %s34 = int_to_ptr.hbm [resolvable:$true] %s33
      %s35 = sshll.u32 [#allocation2], 4
      %s36 = int_to_ptr.vmem [resolvable:$true] %s35
      %38 = dma.hbm_to_vmem [thread:$0]  %s34, 32, %s36, [#allocation3]
    $region17: #{tpu_custom_call.1} parent=1 // pred_fallthru
      _
    // Predicated region
    $region18: #{tpu_custom_call.1} parent=1 // pred_check
      _
    $region19: #{tpu_custom_call.1} parent=1 // pred_check_branch
      %40 = sbr.rel (0) target = $region21
    $region20: #{tpu_custom_call.1} parent=1 // pred_region
      %42 = vsyncadd [#allocation6], 0
      %s43 = sshll.u32 %s4, 4
      %s44 = int_to_ptr.hbm [resolvable:$true] %s43
      %s45 = sshll.u32 [#allocation5], 4
      %s46 = int_to_ptr.vmem [resolvable:$true] %s45
      %51 = dma.hbm_to_vmem [thread:$0]  %s44, 2048, %s46, [#allocation6], 128, 128, 8
    $region21: #{tpu_custom_call.1} parent=1 // pred_fallthru
      _
    // Predicated region
    $region22: #{tpu_custom_call.1} parent=1 // pred_check
      _
    $region23: #{tpu_custom_call.1} parent=1 // pred_check_branch
      %53 = sbr.rel (0) target = $region25
    $region24: #{tpu_custom_call.1} parent=1 // pred_region
      %55 = vsyncadd [#allocation6], 0
      %s57 = sshll.u32 %s5, 4
      %s58 = int_to_ptr.hbm [resolvable:$true] %s57
      %s59 = sshll.u32 [#allocation7], 4
      %s60 = int_to_ptr.vmem [resolvable:$true] %s59
      %62 = dma.hbm_to_vmem [thread:$0]  %s58, 16, %s60, [#allocation6]
    $region25: #{tpu_custom_call.1} parent=1 // pred_fallthru
      _
    // Predicated region
    $region26: #{tpu_custom_call.1} parent=1 // pred_check
      _
    $region27: #{tpu_custom_call.1} parent=1 // pred_check_branch
      %64 = sbr.rel (0) target = $region29
    $region28: #{tpu_custom_call.1} parent=1 // pred_region
      %66 = vsyncadd [#allocation9], 0
      %s67 = sshll.u32 %s6, 4
      %s68 = int_to_ptr.hbm [resolvable:$true] %s67
      %s69 = sshll.u32 [#allocation8], 4
      %s70 = int_to_ptr.vmem [resolvable:$true] %s69
      %75 = dma.hbm_to_vmem [thread:$0]  %s68, 12288, %s70, [#allocation9], 256, 256, 16
    $region29: #{tpu_custom_call.1} parent=1 // pred_fallthru
      _
    // Predicated region
    $region30: #{tpu_custom_call.1} parent=1 // pred_check
      _
    $region31: #{tpu_custom_call.1} parent=1 // pred_check_branch
      %77 = sbr.rel (0) target = $region33
    $region32: #{tpu_custom_call.1} parent=1 // pred_region
      %79 = vsyncadd [#allocation9], 0
      %s80 = sshll.u32 %s7, 4
      %s81 = int_to_ptr.hbm [resolvable:$true] %s80
      %s82 = sshll.u32 [#allocation10], 4
      %s83 = int_to_ptr.vmem [resolvable:$true] %s82
      %88 = dma.hbm_to_vmem [thread:$0]  %s81, 12288, %s83, [#allocation9], 256, 256, 16
    $region33: #{tpu_custom_call.1} parent=1 // pred_fallthru
      _
    // Predicated region
    $region34: #{tpu_custom_call.1} parent=1 // pred_check
      _
    $region35: #{tpu_custom_call.1} parent=1 // pred_check_branch
      %90 = sbr.rel (0) target = $region37
    $region36: #{tpu_custom_call.1} parent=1 // pred_region
      %92 = vsyncadd [#allocation12], 0
      %s93 = sshll.u32 %s8, 4
      %s94 = int_to_ptr.hbm [resolvable:$true] %s93
      %s95 = sshll.u32 [#allocation11], 4
      %s96 = int_to_ptr.vmem [resolvable:$true] %s95
      %101 = dma.hbm_to_vmem [thread:$0]  %s94, 12288, %s96, [#allocation12], 256, 256, 16
    $region37: #{tpu_custom_call.1} parent=1 // pred_fallthru
      _
    // Predicated region
    $region38: #{tpu_custom_call.1} parent=1 // pred_check
      _
    $region39: #{tpu_custom_call.1} parent=1 // pred_check_branch
      %103 = sbr.rel (0) target = $region41
    $region40: #{tpu_custom_call.1} parent=1 // pred_region
      _
    $region41: #{tpu_custom_call.1} parent=1 // pred_fallthru
      _
    // Predicated region
    $region42: #{tpu_custom_call.1} parent=1 // pred_check
      _
    $region43: #{tpu_custom_call.1} parent=1 // pred_check_branch
      %105 = sbr.rel (0) target = $region45
    $region44: #{tpu_custom_call.1} parent=1 // pred_region
      _
    $region45: #{tpu_custom_call.1} parent=1 // pred_fallthru
      _
    // Predicated region
    $region46: #{tpu_custom_call.1} parent=1 // pred_check
      _
    $region47: #{tpu_custom_call.1} parent=1 // pred_check_branch
      %107 = sbr.rel (0) target = $region49
    $region48: #{tpu_custom_call.1} parent=1 // pred_region
      %109 = vsyncadd [#allocation12], 0
      %s110 = sshll.u32 %s11, 4
      %s111 = int_to_ptr.hbm [resolvable:$true] %s110
      %s112 = sshll.u32 [#allocation13], 4
      %s113 = int_to_ptr.vmem [resolvable:$true] %s112
      %118 = dma.hbm_to_vmem [thread:$0]  %s111, 48, %s113, [#allocation12], 16, 16, 1
    $region49: #{tpu_custom_call.1} parent=1 // pred_fallthru
      _
    // Predicated region
    $region50: #{tpu_custom_call.1} parent=1 // pred_check
      _
    $region51: #{tpu_custom_call.1} parent=1 // pred_check_branch
      %120 = sbr.rel (0) target = $region53
    $region52: #{tpu_custom_call.1} parent=1 // pred_region
      %122 = dma.done [#allocation3], 32
    $region53: #{tpu_custom_call.1} parent=1 // pred_fallthru
      _
    // Predicated region
    $region54: #{tpu_custom_call.1} parent=1 // pred_check
      _
    $region55: #{tpu_custom_call.1} parent=1 // pred_check_branch
      %124 = sbr.rel (0) target = $region57
    $region56: #{tpu_custom_call.1} parent=1 // pred_region
      %126 = dma.done [#allocation6], 2048
    $region57: #{tpu_custom_call.1} parent=1 // pred_fallthru
      _
    // Predicated region
    $region58: #{tpu_custom_call.1} parent=1 // pred_check
      _
    $region59: #{tpu_custom_call.1} parent=1 // pred_check_branch
      %128 = sbr.rel (0) target = $region61
    $region60: #{tpu_custom_call.1} parent=1 // pred_region
      %130 = dma.done [#allocation6], 16
    $region61: #{tpu_custom_call.1} parent=1 // pred_fallthru
      _
    // Predicated region
    $region62: #{tpu_custom_call.1} parent=1 // pred_check
      _
    $region63: #{tpu_custom_call.1} parent=1 // pred_check_branch
      %132 = sbr.rel (0) target = $region65
    $region64: #{tpu_custom_call.1} parent=1 // pred_region
      %134 = dma.done [#allocation9], 12288
    $region65: #{tpu_custom_call.1} parent=1 // pred_fallthru
      _
    // Predicated region
    $region66: #{tpu_custom_call.1} parent=1 // pred_check
      _
    $region67: #{tpu_custom_call.1} parent=1 // pred_check_branch
      %136 = sbr.rel (0) target = $region69
    $region68: #{tpu_custom_call.1} parent=1 // pred_region
      %138 = dma.done [#allocation9], 12288
    $region69: #{tpu_custom_call.1} parent=1 // pred_fallthru
      _
    // Predicated region
    $region70: #{tpu_custom_call.1} parent=1 // pred_check
      _
    $region71: #{tpu_custom_call.1} parent=1 // pred_check_branch
      %140 = sbr.rel (0) target = $region73
    $region72: #{tpu_custom_call.1} parent=1 // pred_region
      %142 = dma.done [#allocation12], 12288
    $region73: #{tpu_custom_call.1} parent=1 // pred_fallthru
      _
    // Predicated region
    $region74: #{tpu_custom_call.1} parent=1 // pred_check
      _
    $region75: #{tpu_custom_call.1} parent=1 // pred_check_branch
      %144 = sbr.rel (0) target = $region77
    $region76: #{tpu_custom_call.1} parent=1 // pred_region
      %146 = dma.done [#allocation12], 48
    $region77: #{tpu_custom_call.1} parent=1 // pred_fallthru
      _
    %v147 = vlaneseq
    %v148 = vand.u32 %v147, 127
    %vm149 = vcmp.lt.s32.totalorder %v148, 32
    %v150 = vsel %vm149, 1, 0
    %v151 = vcvt.s32.f32 %v150
    %v152 = vld [vmem:[%s1] sm:$0xff]
    %v153 = vld [vmem:[%s1 + $0x8] sm:$0xff]
    %v154 = vld [vmem:[%s1 + $0x10] sm:$0xff]
    %v155 = vld [vmem:[%s1 + $0x18] sm:$0xff]
    %v156 = vld [vmem:[%s2] sm:$0xff]
    %v157 = vld [vmem:[%s2 + $0x8] sm:$0xff]
    %v158 = vld [vmem:[%s2 + $0x10] sm:$0xff]
    %v159 = vld [vmem:[%s2 + $0x18] sm:$0xff]
    %v160 = vld [vmem:[%s0] sm:$0xff]
    %v161 = vld [vmem:[#allocation5] sm:$0xff]
    %v162 = vld [vmem:[#allocation5 + $0x8] sm:$0xff]
    %v163 = vld [vmem:[#allocation5 + $0x10] sm:$0xff]
    %v164 = vld [vmem:[#allocation5 + $0x18] sm:$0xff]
    %v165 = vld [vmem:[#allocation5 + $0x20] sm:$0xff]
    %v166 = vld [vmem:[#allocation5 + $0x28] sm:$0xff]
    %v167 = vld [vmem:[#allocation5 + $0x30] sm:$0xff]
    %v168 = vld [vmem:[#allocation5 + $0x38] sm:$0xff]
    %v169 = vld [vmem:[#allocation5 + $0x40] sm:$0xff]
    %v170 = vld [vmem:[#allocation5 + $0x48] sm:$0xff]
    %v171 = vld [vmem:[#allocation5 + $0x50] sm:$0xff]
    %v172 = vld [vmem:[#allocation5 + $0x58] sm:$0xff]
    %v173 = vld [vmem:[#allocation5 + $0x60] sm:$0xff]
    %v174 = vld [vmem:[#allocation5 + $0x68] sm:$0xff]
    %v175 = vld [vmem:[#allocation5 + $0x70] sm:$0xff]
    %v176 = vld [vmem:[#allocation5 + $0x78] sm:$0xff]
    %v177 = vld [vmem:[#allocation7] sm:$0x1]
    %v179 = vperm.slane %v177, 0
    %181 = vmatpush.msra.mxu0 %v176
    %182 = vmatpush.msra.mxu0 %v175
    %183 = vmatpush.msra.mxu0 %v174
    %184 = vmatpush.msra.mxu0 %v173
    %185 = vmatpush.msra.mxu0 %v172
    %186 = vmatpush.msra.mxu0 %v171
    %187 = vmatpush.msra.mxu0 %v170
    %188 = vmatpush.msra.mxu0 %v169
    %189 = vmatpush.msra.mxu0 %v168
    %190 = vmatpush.msra.mxu0 %v167
    %191 = vmatpush.msra.mxu0 %v166
    %192 = vmatpush.msra.mxu0 %v165
    %193 = vmatpush.msra.mxu0 %v164
    %194 = vmatpush.msra.mxu0 %v163
    %195 = vmatpush.msra.mxu0 %v162
    %196 = vmatpush.msra.mxu0 %v161
    %197 = vmatmul.f32.gmra.mxu0 %v160
    %v198 = vpop.f32.mrf.mxu0
    %v199 = vadd.f32 %v179, %v198
    %200 = vdwg.mxu0
    %v201 = vmul.f32 %v199, %v151
    %v202 = vld [vmem:[#allocation8] sm:$0xff]
    %v203 = vld [vmem:[#allocation8 + $0x8] sm:$0xff]
    %v204 = vld [vmem:[#allocation8 + $0x10] sm:$0xff]
    %v205 = vld [vmem:[#allocation8 + $0x18] sm:$0xff]
    %v206 = vld [vmem:[#allocation8 + $0x20] sm:$0xff]
    %v207 = vld [vmem:[#allocation8 + $0x28] sm:$0xff]
    %v208 = vld [vmem:[#allocation8 + $0x30] sm:$0xff]
    %v209 = vld [vmem:[#allocation8 + $0x38] sm:$0xff]
    %v210 = vld [vmem:[#allocation8 + $0x40] sm:$0xff]
    %v211 = vld [vmem:[#allocation8 + $0x48] sm:$0xff]
    %v212 = vld [vmem:[#allocation8 + $0x50] sm:$0xff]
    %v213 = vld [vmem:[#allocation8 + $0x58] sm:$0xff]
    %v214 = vld [vmem:[#allocation8 + $0x60] sm:$0xff]
    %v215 = vld [vmem:[#allocation8 + $0x68] sm:$0xff]
    %v216 = vld [vmem:[#allocation8 + $0x70] sm:$0xff]
    %v217 = vld [vmem:[#allocation8 + $0x78] sm:$0xff]
    %v218 = vld [vmem:[#allocation8 + $0x80] sm:$0xff]
    %v219 = vld [vmem:[#allocation8 + $0x88] sm:$0xff]
    %v220 = vld [vmem:[#allocation8 + $0x90] sm:$0xff]
    %v221 = vld [vmem:[#allocation8 + $0x98] sm:$0xff]
    %v222 = vld [vmem:[#allocation8 + $0xa0] sm:$0xff]
    %v223 = vld [vmem:[#allocation8 + $0xa8] sm:$0xff]
    %v224 = vld [vmem:[#allocation8 + $0xb0] sm:$0xff]
    %v225 = vld [vmem:[#allocation8 + $0xb8] sm:$0xff]
    %v226 = vld [vmem:[#allocation8 + $0xc0] sm:$0xff]
    %v227 = vld [vmem:[#allocation8 + $0xc8] sm:$0xff]
    %v228 = vld [vmem:[#allocation8 + $0xd0] sm:$0xff]
    %v229 = vld [vmem:[#allocation8 + $0xd8] sm:$0xff]
    %v230 = vld [vmem:[#allocation8 + $0xe0] sm:$0xff]
    %v231 = vld [vmem:[#allocation8 + $0xe8] sm:$0xff]
    %v232 = vld [vmem:[#allocation8 + $0xf0] sm:$0xff]
    %v233 = vld [vmem:[#allocation8 + $0xf8] sm:$0xff]
    %v234 = vld [vmem:[%s9] sm:$0x3]
    %v236 = vperm.slane %v234, 0
    %v237 = vperm.slane %v234, 1
    %240 = vmatpush.msra.mxu0 %v232
    %241 = vmatpush.msra.mxu0 %v230
    %242 = vmatpush.msra.mxu0 %v228
    %243 = vmatpush.msra.mxu0 %v226
    %244 = vmatpush.msra.mxu0 %v224
    %245 = vmatpush.msra.mxu0 %v222
    %246 = vmatpush.msra.mxu0 %v220
    %247 = vmatpush.msra.mxu0 %v218
    %248 = vmatpush.msra.mxu0 %v216
    %249 = vmatpush.msra.mxu0 %v214
    %250 = vmatpush.msra.mxu0 %v212
    %251 = vmatpush.msra.mxu0 %v210
    %252 = vmatpush.msra.mxu0 %v208
    %253 = vmatpush.msra.mxu0 %v206
    %254 = vmatpush.msra.mxu0 %v204
    %255 = vmatpush.msra.mxu0 %v202
    %256 = vmatmul.f32.gmra.mxu0 %v201
    %v257 = vpop.f32.mrf.mxu0
    %v258 = vadd.f32 %v236, %v257
    %259 = vdwg.mxu0
    %260 = vmatpush.msra.mxu0 %v233
    %261 = vmatpush.msra.mxu0 %v231
    %262 = vmatpush.msra.mxu0 %v229
    %263 = vmatpush.msra.mxu0 %v227
    %264 = vmatpush.msra.mxu0 %v225
    %265 = vmatpush.msra.mxu0 %v223
    %266 = vmatpush.msra.mxu0 %v221
    %267 = vmatpush.msra.mxu0 %v219
    %268 = vmatpush.msra.mxu0 %v217
    %269 = vmatpush.msra.mxu0 %v215
    %270 = vmatpush.msra.mxu0 %v213
    %271 = vmatpush.msra.mxu0 %v211
    %272 = vmatpush.msra.mxu0 %v209
    %273 = vmatpush.msra.mxu0 %v207
    %274 = vmatpush.msra.mxu0 %v205
    %275 = vmatpush.msra.mxu0 %v203
    %276 = vmatmul.f32.gmra.mxu0 %v201
    %v277 = vpop.f32.mrf.mxu0
    %v278 = vadd.f32 %v237, %v277
    %279 = vdwg.mxu0
    %v280 = vld [vmem:[#allocation10] sm:$0xff]
    %v281 = vld [vmem:[#allocation10 + $0x8] sm:$0xff]
    %v282 = vld [vmem:[#allocation10 + $0x10] sm:$0xff]
    %v283 = vld [vmem:[#allocation10 + $0x18] sm:$0xff]
    %v284 = vld [vmem:[#allocation10 + $0x20] sm:$0xff]
    %v285 = vld [vmem:[#allocation10 + $0x28] sm:$0xff]
    %v286 = vld [vmem:[#allocation10 + $0x30] sm:$0xff]
    %v287 = vld [vmem:[#allocation10 + $0x38] sm:$0xff]
    %v288 = vld [vmem:[#allocation10 + $0x40] sm:$0xff]
    %v289 = vld [vmem:[#allocation10 + $0x48] sm:$0xff]
    %v290 = vld [vmem:[#allocation10 + $0x50] sm:$0xff]
    %v291 = vld [vmem:[#allocation10 + $0x58] sm:$0xff]
    %v292 = vld [vmem:[#allocation10 + $0x60] sm:$0xff]
    %v293 = vld [vmem:[#allocation10 + $0x68] sm:$0xff]
    %v294 = vld [vmem:[#allocation10 + $0x70] sm:$0xff]
    %v295 = vld [vmem:[#allocation10 + $0x78] sm:$0xff]
    %v296 = vld [vmem:[#allocation10 + $0x80] sm:$0xff]
    %v297 = vld [vmem:[#allocation10 + $0x88] sm:$0xff]
    %v298 = vld [vmem:[#allocation10 + $0x90] sm:$0xff]
    %v299 = vld [vmem:[#allocation10 + $0x98] sm:$0xff]
    %v300 = vld [vmem:[#allocation10 + $0xa0] sm:$0xff]
    %v301 = vld [vmem:[#allocation10 + $0xa8] sm:$0xff]
    %v302 = vld [vmem:[#allocation10 + $0xb0] sm:$0xff]
    %v303 = vld [vmem:[#allocation10 + $0xb8] sm:$0xff]
    %v304 = vld [vmem:[#allocation10 + $0xc0] sm:$0xff]
    %v305 = vld [vmem:[#allocation10 + $0xc8] sm:$0xff]
    %v306 = vld [vmem:[#allocation10 + $0xd0] sm:$0xff]
    %v307 = vld [vmem:[#allocation10 + $0xd8] sm:$0xff]
    %v308 = vld [vmem:[#allocation10 + $0xe0] sm:$0xff]
    %v309 = vld [vmem:[#allocation10 + $0xe8] sm:$0xff]
    %v310 = vld [vmem:[#allocation10 + $0xf0] sm:$0xff]
    %v311 = vld [vmem:[#allocation10 + $0xf8] sm:$0xff]
    %312 = vmatpush.msra.mxu0 %v310
    %313 = vmatpush.msra.mxu0 %v308
    %314 = vmatpush.msra.mxu0 %v306
    %315 = vmatpush.msra.mxu0 %v304
    %316 = vmatpush.msra.mxu0 %v302
    %317 = vmatpush.msra.mxu0 %v300
    %318 = vmatpush.msra.mxu0 %v298
    %319 = vmatpush.msra.mxu0 %v296
    %320 = vmatpush.msra.mxu0 %v294
    %321 = vmatpush.msra.mxu0 %v292
    %322 = vmatpush.msra.mxu0 %v290
    %323 = vmatpush.msra.mxu0 %v288
    %324 = vmatpush.msra.mxu0 %v286
    %325 = vmatpush.msra.mxu0 %v284
    %326 = vmatpush.msra.mxu0 %v282
    %327 = vmatpush.msra.mxu0 %v280
    %328 = vmatmul.f32.gmra.mxu0 %v201
    %v329 = vpop.f32.mrf.mxu0
    %v330 = vadd.f32 0.0, %v329
    %331 = vdwg.mxu0
    %332 = vmatpush.msra.mxu0 %v311
    %333 = vmatpush.msra.mxu0 %v309
    %334 = vmatpush.msra.mxu0 %v307
    %335 = vmatpush.msra.mxu0 %v305
    %336 = vmatpush.msra.mxu0 %v303
    %337 = vmatpush.msra.mxu0 %v301
    %338 = vmatpush.msra.mxu0 %v299
    %339 = vmatpush.msra.mxu0 %v297
    %340 = vmatpush.msra.mxu0 %v295
    %341 = vmatpush.msra.mxu0 %v293
    %342 = vmatpush.msra.mxu0 %v291
    %343 = vmatpush.msra.mxu0 %v289
    %344 = vmatpush.msra.mxu0 %v287
    %345 = vmatpush.msra.mxu0 %v285
    %346 = vmatpush.msra.mxu0 %v283
    %347 = vmatpush.msra.mxu0 %v281
    %348 = vmatmul.f32.gmra.mxu0 %v201
    %v349 = vpop.f32.mrf.mxu0
    %v350 = vadd.f32 0.0, %v349
    %351 = vdwg.mxu0
    %v352 = vld [vmem:[#allocation11] sm:$0xff]
    %v353 = vld [vmem:[#allocation11 + $0x8] sm:$0xff]
    %v354 = vld [vmem:[#allocation11 + $0x10] sm:$0xff]
    %v355 = vld [vmem:[#allocation11 + $0x18] sm:$0xff]
    %v356 = vld [vmem:[#allocation11 + $0x20] sm:$0xff]
    %v357 = vld [vmem:[#allocation11 + $0x28] sm:$0xff]
    %v358 = vld [vmem:[#allocation11 + $0x30] sm:$0xff]
    %v359 = vld [vmem:[#allocation11 + $0x38] sm:$0xff]
    %v360 = vld [vmem:[#allocation11 + $0x40] sm:$0xff]
    %v361 = vld [vmem:[#allocation11 + $0x48] sm:$0xff]
    %v362 = vld [vmem:[#allocation11 + $0x50] sm:$0xff]
    %v363 = vld [vmem:[#allocation11 + $0x58] sm:$0xff]
    %v364 = vld [vmem:[#allocation11 + $0x60] sm:$0xff]
    %v365 = vld [vmem:[#allocation11 + $0x68] sm:$0xff]
    %v366 = vld [vmem:[#allocation11 + $0x70] sm:$0xff]
    %v367 = vld [vmem:[#allocation11 + $0x78] sm:$0xff]
    %v368 = vld [vmem:[#allocation11 + $0x80] sm:$0xff]
    %v369 = vld [vmem:[#allocation11 + $0x88] sm:$0xff]
    %v370 = vld [vmem:[#allocation11 + $0x90] sm:$0xff]
    %v371 = vld [vmem:[#allocation11 + $0x98] sm:$0xff]
    %v372 = vld [vmem:[#allocation11 + $0xa0] sm:$0xff]
    %v373 = vld [vmem:[#allocation11 + $0xa8] sm:$0xff]
    %v374 = vld [vmem:[#allocation11 + $0xb0] sm:$0xff]
    %v375 = vld [vmem:[#allocation11 + $0xb8] sm:$0xff]
    %v376 = vld [vmem:[#allocation11 + $0xc0] sm:$0xff]
    %v377 = vld [vmem:[#allocation11 + $0xc8] sm:$0xff]
    %v378 = vld [vmem:[#allocation11 + $0xd0] sm:$0xff]
    %v379 = vld [vmem:[#allocation11 + $0xd8] sm:$0xff]
    %v380 = vld [vmem:[#allocation11 + $0xe0] sm:$0xff]
    %v381 = vld [vmem:[#allocation11 + $0xe8] sm:$0xff]
    %v382 = vld [vmem:[#allocation11 + $0xf0] sm:$0xff]
    %v383 = vld [vmem:[#allocation11 + $0xf8] sm:$0xff]
    %384 = vmatpush.msra.mxu0 %v382
    %385 = vmatpush.msra.mxu0 %v380
    %386 = vmatpush.msra.mxu0 %v378
    %387 = vmatpush.msra.mxu0 %v376
    %388 = vmatpush.msra.mxu0 %v374
    %389 = vmatpush.msra.mxu0 %v372
    %390 = vmatpush.msra.mxu0 %v370
    %391 = vmatpush.msra.mxu0 %v368
    %392 = vmatpush.msra.mxu0 %v366
    %393 = vmatpush.msra.mxu0 %v364
    %394 = vmatpush.msra.mxu0 %v362
    %395 = vmatpush.msra.mxu0 %v360
    %396 = vmatpush.msra.mxu0 %v358
    %397 = vmatpush.msra.mxu0 %v356
    %398 = vmatpush.msra.mxu0 %v354
    %399 = vmatpush.msra.mxu0 %v352
    %400 = vmatmul.f32.gmra.mxu0 %v152
    %v401 = vpop.f32.mrf.mxu0
    %v402 = vadd.f32 0.0, %v401
    %403 = vmatmul.f32.gmra.mxu0 %v153
    %v404 = vpop.f32.mrf.mxu0
    %v405 = vadd.f32 0.0, %v404
    %406 = vmatmul.f32.gmra.mxu0 %v154
    %v407 = vpop.f32.mrf.mxu0
    %v408 = vadd.f32 0.0, %v407
    %409 = vmatmul.f32.gmra.mxu0 %v155
    %v410 = vpop.f32.mrf.mxu0
    %v411 = vadd.f32 0.0, %v410
    %412 = vdwg.mxu0
    %413 = vmatpush.msra.mxu0 %v383
    %414 = vmatpush.msra.mxu0 %v381
    %415 = vmatpush.msra.mxu0 %v379
    %416 = vmatpush.msra.mxu0 %v377
    %417 = vmatpush.msra.mxu0 %v375
    %418 = vmatpush.msra.mxu0 %v373
    %419 = vmatpush.msra.mxu0 %v371
    %420 = vmatpush.msra.mxu0 %v369
    %421 = vmatpush.msra.mxu0 %v367
    %422 = vmatpush.msra.mxu0 %v365
    %423 = vmatpush.msra.mxu0 %v363
    %424 = vmatpush.msra.mxu0 %v361
    %425 = vmatpush.msra.mxu0 %v359
    %426 = vmatpush.msra.mxu0 %v357
    %427 = vmatpush.msra.mxu0 %v355
    %428 = vmatpush.msra.mxu0 %v353
    %429 = vmatmul.f32.gmra.mxu0 %v152
    %v430 = vpop.f32.mrf.mxu0
    %v431 = vadd.f32 0.0, %v430
    %432 = vmatmul.f32.gmra.mxu0 %v153
    %v433 = vpop.f32.mrf.mxu0
    %v434 = vadd.f32 0.0, %v433
    %435 = vmatmul.f32.gmra.mxu0 %v154
    %v436 = vpop.f32.mrf.mxu0
    %v437 = vadd.f32 0.0, %v436
    %438 = vmatmul.f32.gmra.mxu0 %v155
    %v439 = vpop.f32.mrf.mxu0
    %v440 = vadd.f32 0.0, %v439
    %441 = vdwg.mxu0
    %vm442 = vcmask 64512
    %v444 = vsel %vm442, %v156, 0
    %v447 = vsel %vm442, %v157, 0
    %v450 = vsel %vm442, %v158, 0
    %v453 = vsel %vm442, %v159, 0
    %455 = vmatpush.msra.mxu0 0.0
    %456 = vmatpush.msra.mxu0 0.0
    %457 = vmatpush.msra.mxu0 0.0
    %458 = vmatpush.msra.mxu0 0.0
    %459 = vmatpush.msra.mxu0 0.0
    %460 = vmatpush.msra.mxu0 0.0
    %461 = vmatpush.msra.mxu0 0.0
    %462 = vmatpush.msra.mxu0 0.0
    %463 = vmatpush.msra.mxu0 0.0
    %464 = vmatpush.msra.mxu0 0.0
    %465 = vmatpush.msra.mxu0 0.0
    %466 = vmatpush.msra.mxu0 0.0
    %467 = vmatpush.msra.mxu0 0.0
    %468 = vmatpush.msra.mxu0 0.0
    %469 = vmatpush.msra.mxu0 0.0
    %470 = vmatpush.msra.mxu0 %v330
    %471 = vmatmul.f32.gmra.mxu0 %v444
    %v472 = vpop.f32.mrf.mxu0
    %v473 = vadd.f32 %v402, %v472
    %474 = vmatmul.f32.gmra.mxu0 %v447
    %v475 = vpop.f32.mrf.mxu0
    %v476 = vadd.f32 %v405, %v475
    %477 = vmatmul.f32.gmra.mxu0 %v450
    %v478 = vpop.f32.mrf.mxu0
    %v479 = vadd.f32 %v408, %v478
    %480 = vmatmul.f32.gmra.mxu0 %v453
    %v481 = vpop.f32.mrf.mxu0
    %v482 = vadd.f32 %v411, %v481
    %483 = vdwg.mxu0
    %484 = vmatpush.msra.mxu0 0.0
    %485 = vmatpush.msra.mxu0 0.0
    %486 = vmatpush.msra.mxu0 0.0
    %487 = vmatpush.msra.mxu0 0.0
    %488 = vmatpush.msra.mxu0 0.0
    %489 = vmatpush.msra.mxu0 0.0
    %490 = vmatpush.msra.mxu0 0.0
    %491 = vmatpush.msra.mxu0 0.0
    %492 = vmatpush.msra.mxu0 0.0
    %493 = vmatpush.msra.mxu0 0.0
    %494 = vmatpush.msra.mxu0 0.0
    %495 = vmatpush.msra.mxu0 0.0
    %496 = vmatpush.msra.mxu0 0.0
    %497 = vmatpush.msra.mxu0 0.0
    %498 = vmatpush.msra.mxu0 0.0
    %499 = vmatpush.msra.mxu0 %v350
    %500 = vmatmul.f32.gmra.mxu0 %v444
    %v501 = vpop.f32.mrf.mxu0
    %v502 = vadd.f32 %v431, %v501
    %503 = vmatmul.f32.gmra.mxu0 %v447
    %v504 = vpop.f32.mrf.mxu0
    %v505 = vadd.f32 %v434, %v504
    %506 = vmatmul.f32.gmra.mxu0 %v450
    %v507 = vpop.f32.mrf.mxu0
    %v508 = vadd.f32 %v437, %v507
    %509 = vmatmul.f32.gmra.mxu0 %v453
    %v510 = vpop.f32.mrf.mxu0
    %v511 = vadd.f32 %v440, %v510
    %512 = vdwg.mxu0
    %v513 = vadd.f32 %v473, %v258
    %v514 = vadd.f32 %v502, %v278
    %v515 = vsub.f32 0.0, %v513
    %v516 = vmul.f32 %v515, 1.442695
    %v517 = vpow.pop %v516
    %v518 = vadd.f32 %v517, 1.0
    %v519 = vrcp.pop %v518
    %v520 = vmax.f32 %v514, 0.0
    %v521 = vand.u32 2147483647, %v514
    %v522 = vsub.f32 0.0, %v521
    %v523 = vmul.f32 %v522, 1.442695
    %v524 = vpow.pop %v523
    %v525 = vadd.f32 %v524, 1.0
    %v526 = vlog2.pop %v525
    %v527 = vmul.f32 %v526, 0.6931472
    %v528 = vmul.f32 -0.5, %v524
    %v529 = vadd.f32 %v528, 1.0
    %v530 = vmul.f32 %v529, %v524
    %v531 = vand.u32 2147483647, %v524
    %vm532 = vcmp.lt.f32.partialorder %v531, 0.0004427343
    %v533 = vsel %vm532, %v530, %v527
    %v534 = vadd.f32 %v520, %v533
    %v535 = vmul.f32 %v519, %v534
    %v536 = vadd.f32 %v535, 0.0
    %v537 = vadd.f32 %v476, %v258
    %v538 = vadd.f32 %v505, %v278
    %v539 = vsub.f32 0.0, %v537
    %v540 = vmul.f32 %v539, 1.442695
    %v541 = vpow.pop %v540
    %v542 = vadd.f32 %v541, 1.0
    %v543 = vrcp.pop %v542
    %v544 = vmax.f32 %v538, 0.0
    %v545 = vand.u32 2147483647, %v538
    %v546 = vsub.f32 0.0, %v545
    %v547 = vmul.f32 %v546, 1.442695
    %v548 = vpow.pop %v547
    %v549 = vadd.f32 %v548, 1.0
    %v550 = vlog2.pop %v549
    %v551 = vmul.f32 %v550, 0.6931472
    %v552 = vmul.f32 -0.5, %v548
    %v553 = vadd.f32 %v552, 1.0
    %v554 = vmul.f32 %v553, %v548
    %v555 = vand.u32 2147483647, %v548
    %vm556 = vcmp.lt.f32.partialorder %v555, 0.0004427343
    %v557 = vsel %vm556, %v554, %v551
    %v558 = vadd.f32 %v544, %v557
    %v559 = vmul.f32 %v543, %v558
    %v560 = vadd.f32 %v536, %v559
    %v561 = vadd.f32 %v479, %v258
    %v562 = vadd.f32 %v508, %v278
    %v563 = vsub.f32 0.0, %v561
    %v564 = vmul.f32 %v563, 1.442695
    %v565 = vpow.pop %v564
    %v566 = vadd.f32 %v565, 1.0
    %v567 = vrcp.pop %v566
    %v568 = vmax.f32 %v562, 0.0
    %v569 = vand.u32 2147483647, %v562
    %v570 = vsub.f32 0.0, %v569
    %v571 = vmul.f32 %v570, 1.442695
    %v572 = vpow.pop %v571
    %v573 = vadd.f32 %v572, 1.0
    %v574 = vlog2.pop %v573
    %v575 = vmul.f32 %v574, 0.6931472
    %v576 = vmul.f32 -0.5, %v572
    %v577 = vadd.f32 %v576, 1.0
    %v578 = vmul.f32 %v577, %v572
    %v579 = vand.u32 2147483647, %v572
    %vm580 = vcmp.lt.f32.partialorder %v579, 0.0004427343
    %v581 = vsel %vm580, %v578, %v575
    %v582 = vadd.f32 %v568, %v581
    %v583 = vmul.f32 %v567, %v582
    %v584 = vadd.f32 %v560, %v583
    %v585 = vadd.f32 %v482, %v258
    %v586 = vadd.f32 %v511, %v278
    %v587 = vsub.f32 0.0, %v585
    %v588 = vmul.f32 %v587, 1.442695
    %v589 = vpow.pop %v588
    %v590 = vadd.f32 %v589, 1.0
    %v591 = vrcp.pop %v590
    %v592 = vmax.f32 %v586, 0.0
    %v593 = vand.u32 2147483647, %v586
    %v594 = vsub.f32 0.0, %v593
    %v595 = vmul.f32 %v594, 1.442695
    %v596 = vpow.pop %v595
    %v597 = vadd.f32 %v596, 1.0
    %v598 = vlog2.pop %v597
    %v599 = vmul.f32 %v598, 0.6931472
    %v600 = vmul.f32 -0.5, %v596
    %v601 = vadd.f32 %v600, 1.0
    %v602 = vmul.f32 %v601, %v596
    %v603 = vand.u32 2147483647, %v596
    %vm604 = vcmp.lt.f32.partialorder %v603, 0.0004427343
    %v605 = vsel %vm604, %v602, %v599
    %v606 = vadd.f32 %v592, %v605
    %v607 = vmul.f32 %v591, %v606
    %v608 = vadd.f32 %v584, %v607
    %v609 = vld [vmem:[%s10] sm:$0x1]
    %v611 = vperm.slane %v609, 0
    %v613 = vmul.f32 %v608, %v611
    %v614 = vld [vmem:[#allocation13] sm:$0x1]
    %v616 = vperm.slane %v614, 0
    %v618 = vadd.f32 %v613, %v616
    %v619 = vadd.f32 %v201, %v618
    %v620 = vmax.f32 %v619, 0.0
    %v621 = vand.u32 2147483647, %v619
    %v622 = vsub.f32 0.0, %v621
    %v623 = vmul.f32 %v622, 1.442695
    %v624 = vpow.pop %v623
    %v625 = vadd.f32 %v624, 1.0
    %v626 = vlog2.pop %v625
    %v627 = vmul.f32 %v626, 0.6931472
    %v628 = vmul.f32 -0.5, %v624
    %v629 = vadd.f32 %v628, 1.0
    %v630 = vmul.f32 %v629, %v624
    %v631 = vand.u32 2147483647, %v624
    %vm632 = vcmp.lt.f32.partialorder %v631, 0.0004427343
    %v633 = vsel %vm632, %v630, %v627
    %v634 = vadd.f32 %v620, %v633
    %v635 = vmul.f32 %v634, %v151
    %s636 = scalar_lea.vmem [#allocation8], 256
    %v637 = vld [vmem:[%s636] sm:$0xff]
    %v638 = vld [vmem:[%s636 + $0x8] sm:$0xff]
    %v639 = vld [vmem:[%s636 + $0x10] sm:$0xff]
    %v640 = vld [vmem:[%s636 + $0x18] sm:$0xff]
    %v641 = vld [vmem:[%s636 + $0x20] sm:$0xff]
    %v642 = vld [vmem:[%s636 + $0x28] sm:$0xff]
    %v643 = vld [vmem:[%s636 + $0x30] sm:$0xff]
    %v644 = vld [vmem:[%s636 + $0x38] sm:$0xff]
    %v645 = vld [vmem:[%s636 + $0x40] sm:$0xff]
    %v646 = vld [vmem:[%s636 + $0x48] sm:$0xff]
    %v647 = vld [vmem:[%s636 + $0x50] sm:$0xff]
    %v648 = vld [vmem:[%s636 + $0x58] sm:$0xff]
    %v649 = vld [vmem:[%s636 + $0x60] sm:$0xff]
    %v650 = vld [vmem:[%s636 + $0x68] sm:$0xff]
    %v651 = vld [vmem:[%s636 + $0x70] sm:$0xff]
    %v652 = vld [vmem:[%s636 + $0x78] sm:$0xff]
    %v653 = vld [vmem:[%s636 + $0x80] sm:$0xff]
    %v654 = vld [vmem:[%s636 + $0x88] sm:$0xff]
    %v655 = vld [vmem:[%s636 + $0x90] sm:$0xff]
    %v656 = vld [vmem:[%s636 + $0x98] sm:$0xff]
    %v657 = vld [vmem:[%s636 + $0xa0] sm:$0xff]
    %v658 = vld [vmem:[%s636 + $0xa8] sm:$0xff]
    %v659 = vld [vmem:[%s636 + $0xb0] sm:$0xff]
    %v660 = vld [vmem:[%s636 + $0xb8] sm:$0xff]
    %v661 = vld [vmem:[%s636 + $0xc0] sm:$0xff]
    %v662 = vld [vmem:[%s636 + $0xc8] sm:$0xff]
    %v663 = vld [vmem:[%s636 + $0xd0] sm:$0xff]
    %v664 = vld [vmem:[%s636 + $0xd8] sm:$0xff]
    %v665 = vld [vmem:[%s636 + $0xe0] sm:$0xff]
    %v666 = vld [vmem:[%s636 + $0xe8] sm:$0xff]
    %v667 = vld [vmem:[%s636 + $0xf0] sm:$0xff]
    %v668 = vld [vmem:[%s636 + $0xf8] sm:$0xff]
    %s669 = scalar_lea.vmem %s9, 2
    %v670 = vld [vmem:[%s669] sm:$0x3]
    %v672 = vperm.slane %v670, 0
    %v673 = vperm.slane %v670, 1
    %676 = vmatpush.msra.mxu0 %v667
    %677 = vmatpush.msra.mxu0 %v665
    %678 = vmatpush.msra.mxu0 %v663
    %679 = vmatpush.msra.mxu0 %v661
    %680 = vmatpush.msra.mxu0 %v659
    %681 = vmatpush.msra.mxu0 %v657
    %682 = vmatpush.msra.mxu0 %v655
    %683 = vmatpush.msra.mxu0 %v653
    %684 = vmatpush.msra.mxu0 %v651
    %685 = vmatpush.msra.mxu0 %v649
    %686 = vmatpush.msra.mxu0 %v647
    %687 = vmatpush.msra.mxu0 %v645
    %688 = vmatpush.msra.mxu0 %v643
    %689 = vmatpush.msra.mxu0 %v641
    %690 = vmatpush.msra.mxu0 %v639
    %691 = vmatpush.msra.mxu0 %v637
    %692 = vmatmul.f32.gmra.mxu0 %v635
    %v693 = vpop.f32.mrf.mxu0
    %v694 = vadd.f32 %v672, %v693
    %695 = vdwg.mxu0
    %696 = vmatpush.msra.mxu0 %v668
    %697 = vmatpush.msra.mxu0 %v666
    %698 = vmatpush.msra.mxu0 %v664
    %699 = vmatpush.msra.mxu0 %v662
    %700 = vmatpush.msra.mxu0 %v660
    %701 = vmatpush.msra.mxu0 %v658
    %702 = vmatpush.msra.mxu0 %v656
    %703 = vmatpush.msra.mxu0 %v654
    %704 = vmatpush.msra.mxu0 %v652
    %705 = vmatpush.msra.mxu0 %v650
    %706 = vmatpush.msra.mxu0 %v648
    %707 = vmatpush.msra.mxu0 %v646
    %708 = vmatpush.msra.mxu0 %v644
    %709 = vmatpush.msra.mxu0 %v642
    %710 = vmatpush.msra.mxu0 %v640
    %711 = vmatpush.msra.mxu0 %v638
    %712 = vmatmul.f32.gmra.mxu0 %v635
    %v713 = vpop.f32.mrf.mxu0
    %v714 = vadd.f32 %v673, %v713
    %715 = vdwg.mxu0
    %s716 = scalar_lea.vmem [#allocation10], 256
    %v717 = vld [vmem:[%s716] sm:$0xff]
    %v718 = vld [vmem:[%s716 + $0x8] sm:$0xff]
    %v719 = vld [vmem:[%s716 + $0x10] sm:$0xff]
    %v720 = vld [vmem:[%s716 + $0x18] sm:$0xff]
    %v721 = vld [vmem:[%s716 + $0x20] sm:$0xff]
    %v722 = vld [vmem:[%s716 + $0x28] sm:$0xff]
    %v723 = vld [vmem:[%s716 + $0x30] sm:$0xff]
    %v724 = vld [vmem:[%s716 + $0x38] sm:$0xff]
    %v725 = vld [vmem:[%s716 + $0x40] sm:$0xff]
    %v726 = vld [vmem:[%s716 + $0x48] sm:$0xff]
    %v727 = vld [vmem:[%s716 + $0x50] sm:$0xff]
    %v728 = vld [vmem:[%s716 + $0x58] sm:$0xff]
    %v729 = vld [vmem:[%s716 + $0x60] sm:$0xff]
    %v730 = vld [vmem:[%s716 + $0x68] sm:$0xff]
    %v731 = vld [vmem:[%s716 + $0x70] sm:$0xff]
    %v732 = vld [vmem:[%s716 + $0x78] sm:$0xff]
    %v733 = vld [vmem:[%s716 + $0x80] sm:$0xff]
    %v734 = vld [vmem:[%s716 + $0x88] sm:$0xff]
    %v735 = vld [vmem:[%s716 + $0x90] sm:$0xff]
    %v736 = vld [vmem:[%s716 + $0x98] sm:$0xff]
    %v737 = vld [vmem:[%s716 + $0xa0] sm:$0xff]
    %v738 = vld [vmem:[%s716 + $0xa8] sm:$0xff]
    %v739 = vld [vmem:[%s716 + $0xb0] sm:$0xff]
    %v740 = vld [vmem:[%s716 + $0xb8] sm:$0xff]
    %v741 = vld [vmem:[%s716 + $0xc0] sm:$0xff]
    %v742 = vld [vmem:[%s716 + $0xc8] sm:$0xff]
    %v743 = vld [vmem:[%s716 + $0xd0] sm:$0xff]
    %v744 = vld [vmem:[%s716 + $0xd8] sm:$0xff]
    %v745 = vld [vmem:[%s716 + $0xe0] sm:$0xff]
    %v746 = vld [vmem:[%s716 + $0xe8] sm:$0xff]
    %v747 = vld [vmem:[%s716 + $0xf0] sm:$0xff]
    %v748 = vld [vmem:[%s716 + $0xf8] sm:$0xff]
    %749 = vmatpush.msra.mxu0 %v747
    %750 = vmatpush.msra.mxu0 %v745
    %751 = vmatpush.msra.mxu0 %v743
    %752 = vmatpush.msra.mxu0 %v741
    %753 = vmatpush.msra.mxu0 %v739
    %754 = vmatpush.msra.mxu0 %v737
    %755 = vmatpush.msra.mxu0 %v735
    %756 = vmatpush.msra.mxu0 %v733
    %757 = vmatpush.msra.mxu0 %v731
    %758 = vmatpush.msra.mxu0 %v729
    %759 = vmatpush.msra.mxu0 %v727
    %760 = vmatpush.msra.mxu0 %v725
    %761 = vmatpush.msra.mxu0 %v723
    %762 = vmatpush.msra.mxu0 %v721
    %763 = vmatpush.msra.mxu0 %v719
    %764 = vmatpush.msra.mxu0 %v717
    %765 = vmatmul.f32.gmra.mxu0 %v635
    %v766 = vpop.f32.mrf.mxu0
    %v767 = vadd.f32 0.0, %v766
    %768 = vdwg.mxu0
    %769 = vmatpush.msra.mxu0 %v748
    %770 = vmatpush.msra.mxu0 %v746
    %771 = vmatpush.msra.mxu0 %v744
    %772 = vmatpush.msra.mxu0 %v742
    %773 = vmatpush.msra.mxu0 %v740
    %774 = vmatpush.msra.mxu0 %v738
    %775 = vmatpush.msra.mxu0 %v736
    %776 = vmatpush.msra.mxu0 %v734
    %777 = vmatpush.msra.mxu0 %v732
    %778 = vmatpush.msra.mxu0 %v730
    %779 = vmatpush.msra.mxu0 %v728
    %780 = vmatpush.msra.mxu0 %v726
    %781 = vmatpush.msra.mxu0 %v724
    %782 = vmatpush.msra.mxu0 %v722
    %783 = vmatpush.msra.mxu0 %v720
    %784 = vmatpush.msra.mxu0 %v718
    %785 = vmatmul.f32.gmra.mxu0 %v635
    %v786 = vpop.f32.mrf.mxu0
    %v787 = vadd.f32 0.0, %v786
    %788 = vdwg.mxu0
    %s789 = scalar_lea.vmem [#allocation11], 256
    %v790 = vld [vmem:[%s789] sm:$0xff]
    %v791 = vld [vmem:[%s789 + $0x8] sm:$0xff]
    %v792 = vld [vmem:[%s789 + $0x10] sm:$0xff]
    %v793 = vld [vmem:[%s789 + $0x18] sm:$0xff]
    %v794 = vld [vmem:[%s789 + $0x20] sm:$0xff]
    %v795 = vld [vmem:[%s789 + $0x28] sm:$0xff]
    %v796 = vld [vmem:[%s789 + $0x30] sm:$0xff]
    %v797 = vld [vmem:[%s789 + $0x38] sm:$0xff]
    %v798 = vld [vmem:[%s789 + $0x40] sm:$0xff]
    %v799 = vld [vmem:[%s789 + $0x48] sm:$0xff]
    %v800 = vld [vmem:[%s789 + $0x50] sm:$0xff]
    %v801 = vld [vmem:[%s789 + $0x58] sm:$0xff]
    %v802 = vld [vmem:[%s789 + $0x60] sm:$0xff]
    %v803 = vld [vmem:[%s789 + $0x68] sm:$0xff]
    %v804 = vld [vmem:[%s789 + $0x70] sm:$0xff]
    %v805 = vld [vmem:[%s789 + $0x78] sm:$0xff]
    %v806 = vld [vmem:[%s789 + $0x80] sm:$0xff]
    %v807 = vld [vmem:[%s789 + $0x88] sm:$0xff]
    %v808 = vld [vmem:[%s789 + $0x90] sm:$0xff]
    %v809 = vld [vmem:[%s789 + $0x98] sm:$0xff]
    %v810 = vld [vmem:[%s789 + $0xa0] sm:$0xff]
    %v811 = vld [vmem:[%s789 + $0xa8] sm:$0xff]
    %v812 = vld [vmem:[%s789 + $0xb0] sm:$0xff]
    %v813 = vld [vmem:[%s789 + $0xb8] sm:$0xff]
    %v814 = vld [vmem:[%s789 + $0xc0] sm:$0xff]
    %v815 = vld [vmem:[%s789 + $0xc8] sm:$0xff]
    %v816 = vld [vmem:[%s789 + $0xd0] sm:$0xff]
    %v817 = vld [vmem:[%s789 + $0xd8] sm:$0xff]
    %v818 = vld [vmem:[%s789 + $0xe0] sm:$0xff]
    %v819 = vld [vmem:[%s789 + $0xe8] sm:$0xff]
    %v820 = vld [vmem:[%s789 + $0xf0] sm:$0xff]
    %v821 = vld [vmem:[%s789 + $0xf8] sm:$0xff]
    %822 = vmatpush.msra.mxu0 %v820
    %823 = vmatpush.msra.mxu0 %v818
    %824 = vmatpush.msra.mxu0 %v816
    %825 = vmatpush.msra.mxu0 %v814
    %826 = vmatpush.msra.mxu0 %v812
    %827 = vmatpush.msra.mxu0 %v810
    %828 = vmatpush.msra.mxu0 %v808
    %829 = vmatpush.msra.mxu0 %v806
    %830 = vmatpush.msra.mxu0 %v804
    %831 = vmatpush.msra.mxu0 %v802
    %832 = vmatpush.msra.mxu0 %v800
    %833 = vmatpush.msra.mxu0 %v798
    %834 = vmatpush.msra.mxu0 %v796
    %835 = vmatpush.msra.mxu0 %v794
    %836 = vmatpush.msra.mxu0 %v792
    %837 = vmatpush.msra.mxu0 %v790
    %838 = vmatmul.f32.gmra.mxu0 %v152
    %v839 = vpop.f32.mrf.mxu0
    %v840 = vadd.f32 0.0, %v839
    %841 = vmatmul.f32.gmra.mxu0 %v153
    %v842 = vpop.f32.mrf.mxu0
    %v843 = vadd.f32 0.0, %v842
    %844 = vmatmul.f32.gmra.mxu0 %v154
    %v845 = vpop.f32.mrf.mxu0
    %v846 = vadd.f32 0.0, %v845
    %847 = vmatmul.f32.gmra.mxu0 %v155
    %v848 = vpop.f32.mrf.mxu0
    %v849 = vadd.f32 0.0, %v848
    %850 = vdwg.mxu0
    %851 = vmatpush.msra.mxu0 %v821
    %852 = vmatpush.msra.mxu0 %v819
    %853 = vmatpush.msra.mxu0 %v817
    %854 = vmatpush.msra.mxu0 %v815
    %855 = vmatpush.msra.mxu0 %v813
    %856 = vmatpush.msra.mxu0 %v811
    %857 = vmatpush.msra.mxu0 %v809
    %858 = vmatpush.msra.mxu0 %v807
    %859 = vmatpush.msra.mxu0 %v805
    %860 = vmatpush.msra.mxu0 %v803
    %861 = vmatpush.msra.mxu0 %v801
    %862 = vmatpush.msra.mxu0 %v799
    %863 = vmatpush.msra.mxu0 %v797
    %864 = vmatpush.msra.mxu0 %v795
    %865 = vmatpush.msra.mxu0 %v793
    %866 = vmatpush.msra.mxu0 %v791
    %867 = vmatmul.f32.gmra.mxu0 %v152
    %v868 = vpop.f32.mrf.mxu0
    %v869 = vadd.f32 0.0, %v868
    %870 = vmatmul.f32.gmra.mxu0 %v153
    %v871 = vpop.f32.mrf.mxu0
    %v872 = vadd.f32 0.0, %v871
    %873 = vmatmul.f32.gmra.mxu0 %v154
    %v874 = vpop.f32.mrf.mxu0
    %v875 = vadd.f32 0.0, %v874
    %876 = vmatmul.f32.gmra.mxu0 %v155
    %v877 = vpop.f32.mrf.mxu0
    %v878 = vadd.f32 0.0, %v877
    %879 = vdwg.mxu0
    %880 = vmatpush.msra.mxu0 0.0
    %881 = vmatpush.msra.mxu0 0.0
    %882 = vmatpush.msra.mxu0 0.0
    %883 = vmatpush.msra.mxu0 0.0
    %884 = vmatpush.msra.mxu0 0.0
    %885 = vmatpush.msra.mxu0 0.0
    %886 = vmatpush.msra.mxu0 0.0
    %887 = vmatpush.msra.mxu0 0.0
    %888 = vmatpush.msra.mxu0 0.0
    %889 = vmatpush.msra.mxu0 0.0
    %890 = vmatpush.msra.mxu0 0.0
    %891 = vmatpush.msra.mxu0 0.0
    %892 = vmatpush.msra.mxu0 0.0
    %893 = vmatpush.msra.mxu0 0.0
    %894 = vmatpush.msra.mxu0 0.0
    %895 = vmatpush.msra.mxu0 %v767
    %896 = vmatmul.f32.gmra.mxu0 %v444
    %v897 = vpop.f32.mrf.mxu0
    %v898 = vadd.f32 %v840, %v897
    %899 = vmatmul.f32.gmra.mxu0 %v447
    %v900 = vpop.f32.mrf.mxu0
    %v901 = vadd.f32 %v843, %v900
    %902 = vmatmul.f32.gmra.mxu0 %v450
    %v903 = vpop.f32.mrf.mxu0
    %v904 = vadd.f32 %v846, %v903
    %905 = vmatmul.f32.gmra.mxu0 %v453
    %v906 = vpop.f32.mrf.mxu0
    %v907 = vadd.f32 %v849, %v906
    %908 = vdwg.mxu0
    %909 = vmatpush.msra.mxu0 0.0
    %910 = vmatpush.msra.mxu0 0.0
    %911 = vmatpush.msra.mxu0 0.0
    %912 = vmatpush.msra.mxu0 0.0
    %913 = vmatpush.msra.mxu0 0.0
    %914 = vmatpush.msra.mxu0 0.0
    %915 = vmatpush.msra.mxu0 0.0
    %916 = vmatpush.msra.mxu0 0.0
    %917 = vmatpush.msra.mxu0 0.0
    %918 = vmatpush.msra.mxu0 0.0
    %919 = vmatpush.msra.mxu0 0.0
    %920 = vmatpush.msra.mxu0 0.0
    %921 = vmatpush.msra.mxu0 0.0
    %922 = vmatpush.msra.mxu0 0.0
    %923 = vmatpush.msra.mxu0 0.0
    %924 = vmatpush.msra.mxu0 %v787
    %925 = vmatmul.f32.gmra.mxu0 %v444
    %v926 = vpop.f32.mrf.mxu0
    %v927 = vadd.f32 %v869, %v926
    %928 = vmatmul.f32.gmra.mxu0 %v447
    %v929 = vpop.f32.mrf.mxu0
    %v930 = vadd.f32 %v872, %v929
    %931 = vmatmul.f32.gmra.mxu0 %v450
    %v932 = vpop.f32.mrf.mxu0
    %v933 = vadd.f32 %v875, %v932
    %934 = vmatmul.f32.gmra.mxu0 %v453
    %v935 = vpop.f32.mrf.mxu0
    %v936 = vadd.f32 %v878, %v935
    %937 = vdwg.mxu0
    %v938 = vadd.f32 %v898, %v694
    %v939 = vadd.f32 %v927, %v714
    %v940 = vsub.f32 0.0, %v938
    %v941 = vmul.f32 %v940, 1.442695
    %v942 = vpow.pop %v941
    %v943 = vadd.f32 %v942, 1.0
    %v944 = vrcp.pop %v943
    %v945 = vmax.f32 %v939, 0.0
    %v946 = vand.u32 2147483647, %v939
    %v947 = vsub.f32 0.0, %v946
    %v948 = vmul.f32 %v947, 1.442695
    %v949 = vpow.pop %v948
    %v950 = vadd.f32 %v949, 1.0
    %v951 = vlog2.pop %v950
    %v952 = vmul.f32 %v951, 0.6931472
    %v953 = vmul.f32 -0.5, %v949
    %v954 = vadd.f32 %v953, 1.0
    %v955 = vmul.f32 %v954, %v949
    %v956 = vand.u32 2147483647, %v949
    %vm957 = vcmp.lt.f32.partialorder %v956, 0.0004427343
    %v958 = vsel %vm957, %v955, %v952
    %v959 = vadd.f32 %v945, %v958
    %v960 = vmul.f32 %v944, %v959
    %v961 = vadd.f32 %v960, 0.0
    %v962 = vadd.f32 %v901, %v694
    %v963 = vadd.f32 %v930, %v714
    %v964 = vsub.f32 0.0, %v962
    %v965 = vmul.f32 %v964, 1.442695
    %v966 = vpow.pop %v965
    %v967 = vadd.f32 %v966, 1.0
    %v968 = vrcp.pop %v967
    %v969 = vmax.f32 %v963, 0.0
    %v970 = vand.u32 2147483647, %v963
    %v971 = vsub.f32 0.0, %v970
    %v972 = vmul.f32 %v971, 1.442695
    %v973 = vpow.pop %v972
    %v974 = vadd.f32 %v973, 1.0
    %v975 = vlog2.pop %v974
    %v976 = vmul.f32 %v975, 0.6931472
    %v977 = vmul.f32 -0.5, %v973
    %v978 = vadd.f32 %v977, 1.0
    %v979 = vmul.f32 %v978, %v973
    %v980 = vand.u32 2147483647, %v973
    %vm981 = vcmp.lt.f32.partialorder %v980, 0.0004427343
    %v982 = vsel %vm981, %v979, %v976
    %v983 = vadd.f32 %v969, %v982
    %v984 = vmul.f32 %v968, %v983
    %v985 = vadd.f32 %v961, %v984
    %v986 = vadd.f32 %v904, %v694
    %v987 = vadd.f32 %v933, %v714
    %v988 = vsub.f32 0.0, %v986
    %v989 = vmul.f32 %v988, 1.442695
    %v990 = vpow.pop %v989
    %v991 = vadd.f32 %v990, 1.0
    %v992 = vrcp.pop %v991
    %v993 = vmax.f32 %v987, 0.0
    %v994 = vand.u32 2147483647, %v987
    %v995 = vsub.f32 0.0, %v994
    %v996 = vmul.f32 %v995, 1.442695
    %v997 = vpow.pop %v996
    %v998 = vadd.f32 %v997, 1.0
    %v999 = vlog2.pop %v998
    %v1000 = vmul.f32 %v999, 0.6931472
    %v1001 = vmul.f32 -0.5, %v997
    %v1002 = vadd.f32 %v1001, 1.0
    %v1003 = vmul.f32 %v1002, %v997
    %v1004 = vand.u32 2147483647, %v997
    %vm1005 = vcmp.lt.f32.partialorder %v1004, 0.0004427343
    %v1006 = vsel %vm1005, %v1003, %v1000
    %v1007 = vadd.f32 %v993, %v1006
    %v1008 = vmul.f32 %v992, %v1007
    %v1009 = vadd.f32 %v985, %v1008
    %v1010 = vadd.f32 %v907, %v694
    %v1011 = vadd.f32 %v936, %v714
    %v1012 = vsub.f32 0.0, %v1010
    %v1013 = vmul.f32 %v1012, 1.442695
    %v1014 = vpow.pop %v1013
    %v1015 = vadd.f32 %v1014, 1.0
    %v1016 = vrcp.pop %v1015
    %v1017 = vmax.f32 %v1011, 0.0
    %v1018 = vand.u32 2147483647, %v1011
    %v1019 = vsub.f32 0.0, %v1018
    %v1020 = vmul.f32 %v1019, 1.442695
    %v1021 = vpow.pop %v1020
    %v1022 = vadd.f32 %v1021, 1.0
    %v1023 = vlog2.pop %v1022
    %v1024 = vmul.f32 %v1023, 0.6931472
    %v1025 = vmul.f32 -0.5, %v1021
    %v1026 = vadd.f32 %v1025, 1.0
    %v1027 = vmul.f32 %v1026, %v1021
    %v1028 = vand.u32 2147483647, %v1021
    %vm1029 = vcmp.lt.f32.partialorder %v1028, 0.0004427343
    %v1030 = vsel %vm1029, %v1027, %v1024
    %v1031 = vadd.f32 %v1017, %v1030
    %v1032 = vmul.f32 %v1016, %v1031
    %v1033 = vadd.f32 %v1009, %v1032
    %s1034 = scalar_lea.vmem %s10, 1
    %v1035 = vld [vmem:[%s1034] sm:$0x1]
    %v1037 = vperm.slane %v1035, 0
    %v1039 = vmul.f32 %v1033, %v1037
    %s1040 = scalar_lea.vmem [#allocation13], 1
    %v1041 = vld [vmem:[%s1040] sm:$0x1]
    %v1043 = vperm.slane %v1041, 0
    %v1045 = vadd.f32 %v1039, %v1043
    %v1046 = vadd.f32 %v635, %v1045
    %v1047 = vmax.f32 %v1046, 0.0
    %v1048 = vand.u32 2147483647, %v1046
    %v1049 = vsub.f32 0.0, %v1048
    %v1050 = vmul.f32 %v1049, 1.442695
    %v1051 = vpow.pop %v1050
    %v1052 = vadd.f32 %v1051, 1.0
    %v1053 = vlog2.pop %v1052
    %v1054 = vmul.f32 %v1053, 0.6931472
    %v1055 = vmul.f32 -0.5, %v1051
    %v1056 = vadd.f32 %v1055, 1.0
    %v1057 = vmul.f32 %v1056, %v1051
    %v1058 = vand.u32 2147483647, %v1051
    %vm1059 = vcmp.lt.f32.partialorder %v1058, 0.0004427343
    %v1060 = vsel %vm1059, %v1057, %v1054
    %v1061 = vadd.f32 %v1047, %v1060
    %v1062 = vmul.f32 %v1061, %v151
    %s1063 = scalar_lea.vmem [#allocation8], 512
    %v1064 = vld [vmem:[%s1063] sm:$0xff]
    %v1065 = vld [vmem:[%s1063 + $0x8] sm:$0xff]
    %v1066 = vld [vmem:[%s1063 + $0x10] sm:$0xff]
    %v1067 = vld [vmem:[%s1063 + $0x18] sm:$0xff]
    %v1068 = vld [vmem:[%s1063 + $0x20] sm:$0xff]
    %v1069 = vld [vmem:[%s1063 + $0x28] sm:$0xff]
    %v1070 = vld [vmem:[%s1063 + $0x30] sm:$0xff]
    %v1071 = vld [vmem:[%s1063 + $0x38] sm:$0xff]
    %v1072 = vld [vmem:[%s1063 + $0x40] sm:$0xff]
    %v1073 = vld [vmem:[%s1063 + $0x48] sm:$0xff]
    %v1074 = vld [vmem:[%s1063 + $0x50] sm:$0xff]
    %v1075 = vld [vmem:[%s1063 + $0x58] sm:$0xff]
    %v1076 = vld [vmem:[%s1063 + $0x60] sm:$0xff]
    %v1077 = vld [vmem:[%s1063 + $0x68] sm:$0xff]
    %v1078 = vld [vmem:[%s1063 + $0x70] sm:$0xff]
    %v1079 = vld [vmem:[%s1063 + $0x78] sm:$0xff]
    %v1080 = vld [vmem:[%s1063 + $0x80] sm:$0xff]
    %v1081 = vld [vmem:[%s1063 + $0x88] sm:$0xff]
    %v1082 = vld [vmem:[%s1063 + $0x90] sm:$0xff]
    %v1083 = vld [vmem:[%s1063 + $0x98] sm:$0xff]
    %v1084 = vld [vmem:[%s1063 + $0xa0] sm:$0xff]
    %v1085 = vld [vmem:[%s1063 + $0xa8] sm:$0xff]
    %v1086 = vld [vmem:[%s1063 + $0xb0] sm:$0xff]
    %v1087 = vld [vmem:[%s1063 + $0xb8] sm:$0xff]
    %v1088 = vld [vmem:[%s1063 + $0xc0] sm:$0xff]
    %v1089 = vld [vmem:[%s1063 + $0xc8] sm:$0xff]
    %v1090 = vld [vmem:[%s1063 + $0xd0] sm:$0xff]
    %v1091 = vld [vmem:[%s1063 + $0xd8] sm:$0xff]
    %v1092 = vld [vmem:[%s1063 + $0xe0] sm:$0xff]
    %v1093 = vld [vmem:[%s1063 + $0xe8] sm:$0xff]
    %v1094 = vld [vmem:[%s1063 + $0xf0] sm:$0xff]
    %v1095 = vld [vmem:[%s1063 + $0xf8] sm:$0xff]
    %s1096 = scalar_lea.vmem %s9, 4
    %v1097 = vld [vmem:[%s1096] sm:$0x3]
    %v1099 = vperm.slane %v1097, 0
    %v1100 = vperm.slane %v1097, 1
    %1103 = vmatpush.msra.mxu0 %v1094
    %1104 = vmatpush.msra.mxu0 %v1092
    %1105 = vmatpush.msra.mxu0 %v1090
    %1106 = vmatpush.msra.mxu0 %v1088
    %1107 = vmatpush.msra.mxu0 %v1086
    %1108 = vmatpush.msra.mxu0 %v1084
    %1109 = vmatpush.msra.mxu0 %v1082
    %1110 = vmatpush.msra.mxu0 %v1080
    %1111 = vmatpush.msra.mxu0 %v1078
    %1112 = vmatpush.msra.mxu0 %v1076
    %1113 = vmatpush.msra.mxu0 %v1074
    %1114 = vmatpush.msra.mxu0 %v1072
    %1115 = vmatpush.msra.mxu0 %v1070
    %1116 = vmatpush.msra.mxu0 %v1068
    %1117 = vmatpush.msra.mxu0 %v1066
    %1118 = vmatpush.msra.mxu0 %v1064
    %1119 = vmatmul.f32.gmra.mxu0 %v1062
    %v1120 = vpop.f32.mrf.mxu0
    %v1121 = vadd.f32 %v1099, %v1120
    %1122 = vdwg.mxu0
    %1123 = vmatpush.msra.mxu0 %v1095
    %1124 = vmatpush.msra.mxu0 %v1093
    %1125 = vmatpush.msra.mxu0 %v1091
    %1126 = vmatpush.msra.mxu0 %v1089
    %1127 = vmatpush.msra.mxu0 %v1087
    %1128 = vmatpush.msra.mxu0 %v1085
    %1129 = vmatpush.msra.mxu0 %v1083
    %1130 = vmatpush.msra.mxu0 %v1081
    %1131 = vmatpush.msra.mxu0 %v1079
    %1132 = vmatpush.msra.mxu0 %v1077
    %1133 = vmatpush.msra.mxu0 %v1075
    %1134 = vmatpush.msra.mxu0 %v1073
    %1135 = vmatpush.msra.mxu0 %v1071
    %1136 = vmatpush.msra.mxu0 %v1069
    %1137 = vmatpush.msra.mxu0 %v1067
    %1138 = vmatpush.msra.mxu0 %v1065
    %1139 = vmatmul.f32.gmra.mxu0 %v1062
    %v1140 = vpop.f32.mrf.mxu0
    %v1141 = vadd.f32 %v1100, %v1140
    %1142 = vdwg.mxu0
    %s1143 = scalar_lea.vmem [#allocation10], 512
    %v1144 = vld [vmem:[%s1143] sm:$0xff]
    %v1145 = vld [vmem:[%s1143 + $0x8] sm:$0xff]
    %v1146 = vld [vmem:[%s1143 + $0x10] sm:$0xff]
    %v1147 = vld [vmem:[%s1143 + $0x18] sm:$0xff]
    %v1148 = vld [vmem:[%s1143 + $0x20] sm:$0xff]
    %v1149 = vld [vmem:[%s1143 + $0x28] sm:$0xff]
    %v1150 = vld [vmem:[%s1143 + $0x30] sm:$0xff]
    %v1151 = vld [vmem:[%s1143 + $0x38] sm:$0xff]
    %v1152 = vld [vmem:[%s1143 + $0x40] sm:$0xff]
    %v1153 = vld [vmem:[%s1143 + $0x48] sm:$0xff]
    %v1154 = vld [vmem:[%s1143 + $0x50] sm:$0xff]
    %v1155 = vld [vmem:[%s1143 + $0x58] sm:$0xff]
    %v1156 = vld [vmem:[%s1143 + $0x60] sm:$0xff]
    %v1157 = vld [vmem:[%s1143 + $0x68] sm:$0xff]
    %v1158 = vld [vmem:[%s1143 + $0x70] sm:$0xff]
    %v1159 = vld [vmem:[%s1143 + $0x78] sm:$0xff]
    %v1160 = vld [vmem:[%s1143 + $0x80] sm:$0xff]
    %v1161 = vld [vmem:[%s1143 + $0x88] sm:$0xff]
    %v1162 = vld [vmem:[%s1143 + $0x90] sm:$0xff]
    %v1163 = vld [vmem:[%s1143 + $0x98] sm:$0xff]
    %v1164 = vld [vmem:[%s1143 + $0xa0] sm:$0xff]
    %v1165 = vld [vmem:[%s1143 + $0xa8] sm:$0xff]
    %v1166 = vld [vmem:[%s1143 + $0xb0] sm:$0xff]
    %v1167 = vld [vmem:[%s1143 + $0xb8] sm:$0xff]
    %v1168 = vld [vmem:[%s1143 + $0xc0] sm:$0xff]
    %v1169 = vld [vmem:[%s1143 + $0xc8] sm:$0xff]
    %v1170 = vld [vmem:[%s1143 + $0xd0] sm:$0xff]
    %v1171 = vld [vmem:[%s1143 + $0xd8] sm:$0xff]
    %v1172 = vld [vmem:[%s1143 + $0xe0] sm:$0xff]
    %v1173 = vld [vmem:[%s1143 + $0xe8] sm:$0xff]
    %v1174 = vld [vmem:[%s1143 + $0xf0] sm:$0xff]
    %v1175 = vld [vmem:[%s1143 + $0xf8] sm:$0xff]
    %1176 = vmatpush.msra.mxu0 %v1174
    %1177 = vmatpush.msra.mxu0 %v1172
    %1178 = vmatpush.msra.mxu0 %v1170
    %1179 = vmatpush.msra.mxu0 %v1168
    %1180 = vmatpush.msra.mxu0 %v1166
    %1181 = vmatpush.msra.mxu0 %v1164
    %1182 = vmatpush.msra.mxu0 %v1162
    %1183 = vmatpush.msra.mxu0 %v1160
    %1184 = vmatpush.msra.mxu0 %v1158
    %1185 = vmatpush.msra.mxu0 %v1156
    %1186 = vmatpush.msra.mxu0 %v1154
    %1187 = vmatpush.msra.mxu0 %v1152
    %1188 = vmatpush.msra.mxu0 %v1150
    %1189 = vmatpush.msra.mxu0 %v1148
    %1190 = vmatpush.msra.mxu0 %v1146
    %1191 = vmatpush.msra.mxu0 %v1144
    %1192 = vmatmul.f32.gmra.mxu0 %v1062
    %v1193 = vpop.f32.mrf.mxu0
    %v1194 = vadd.f32 0.0, %v1193
    %1195 = vdwg.mxu0
    %1196 = vmatpush.msra.mxu0 %v1175
    %1197 = vmatpush.msra.mxu0 %v1173
    %1198 = vmatpush.msra.mxu0 %v1171
    %1199 = vmatpush.msra.mxu0 %v1169
    %1200 = vmatpush.msra.mxu0 %v1167
    %1201 = vmatpush.msra.mxu0 %v1165
    %1202 = vmatpush.msra.mxu0 %v1163
    %1203 = vmatpush.msra.mxu0 %v1161
    %1204 = vmatpush.msra.mxu0 %v1159
    %1205 = vmatpush.msra.mxu0 %v1157
    %1206 = vmatpush.msra.mxu0 %v1155
    %1207 = vmatpush.msra.mxu0 %v1153
    %1208 = vmatpush.msra.mxu0 %v1151
    %1209 = vmatpush.msra.mxu0 %v1149
    %1210 = vmatpush.msra.mxu0 %v1147
    %1211 = vmatpush.msra.mxu0 %v1145
    %1212 = vmatmul.f32.gmra.mxu0 %v1062
    %v1213 = vpop.f32.mrf.mxu0
    %v1214 = vadd.f32 0.0, %v1213
    %1215 = vdwg.mxu0
    %s1216 = scalar_lea.vmem [#allocation11], 512
    %v1217 = vld [vmem:[%s1216] sm:$0xff]
    %v1218 = vld [vmem:[%s1216 + $0x8] sm:$0xff]
    %v1219 = vld [vmem:[%s1216 + $0x10] sm:$0xff]
    %v1220 = vld [vmem:[%s1216 + $0x18] sm:$0xff]
    %v1221 = vld [vmem:[%s1216 + $0x20] sm:$0xff]
    %v1222 = vld [vmem:[%s1216 + $0x28] sm:$0xff]
    %v1223 = vld [vmem:[%s1216 + $0x30] sm:$0xff]
    %v1224 = vld [vmem:[%s1216 + $0x38] sm:$0xff]
    %v1225 = vld [vmem:[%s1216 + $0x40] sm:$0xff]
    %v1226 = vld [vmem:[%s1216 + $0x48] sm:$0xff]
    %v1227 = vld [vmem:[%s1216 + $0x50] sm:$0xff]
    %v1228 = vld [vmem:[%s1216 + $0x58] sm:$0xff]
    %v1229 = vld [vmem:[%s1216 + $0x60] sm:$0xff]
    %v1230 = vld [vmem:[%s1216 + $0x68] sm:$0xff]
    %v1231 = vld [vmem:[%s1216 + $0x70] sm:$0xff]
    %v1232 = vld [vmem:[%s1216 + $0x78] sm:$0xff]
    %v1233 = vld [vmem:[%s1216 + $0x80] sm:$0xff]
    %v1234 = vld [vmem:[%s1216 + $0x88] sm:$0xff]
    %v1235 = vld [vmem:[%s1216 + $0x90] sm:$0xff]
    %v1236 = vld [vmem:[%s1216 + $0x98] sm:$0xff]
    %v1237 = vld [vmem:[%s1216 + $0xa0] sm:$0xff]
    %v1238 = vld [vmem:[%s1216 + $0xa8] sm:$0xff]
    %v1239 = vld [vmem:[%s1216 + $0xb0] sm:$0xff]
    %v1240 = vld [vmem:[%s1216 + $0xb8] sm:$0xff]
    %v1241 = vld [vmem:[%s1216 + $0xc0] sm:$0xff]
    %v1242 = vld [vmem:[%s1216 + $0xc8] sm:$0xff]
    %v1243 = vld [vmem:[%s1216 + $0xd0] sm:$0xff]
    %v1244 = vld [vmem:[%s1216 + $0xd8] sm:$0xff]
    %v1245 = vld [vmem:[%s1216 + $0xe0] sm:$0xff]
    %v1246 = vld [vmem:[%s1216 + $0xe8] sm:$0xff]
    %v1247 = vld [vmem:[%s1216 + $0xf0] sm:$0xff]
    %v1248 = vld [vmem:[%s1216 + $0xf8] sm:$0xff]
    %1249 = vmatpush.msra.mxu0 %v1247
    %1250 = vmatpush.msra.mxu0 %v1245
    %1251 = vmatpush.msra.mxu0 %v1243
    %1252 = vmatpush.msra.mxu0 %v1241
    %1253 = vmatpush.msra.mxu0 %v1239
    %1254 = vmatpush.msra.mxu0 %v1237
    %1255 = vmatpush.msra.mxu0 %v1235
    %1256 = vmatpush.msra.mxu0 %v1233
    %1257 = vmatpush.msra.mxu0 %v1231
    %1258 = vmatpush.msra.mxu0 %v1229
    %1259 = vmatpush.msra.mxu0 %v1227
    %1260 = vmatpush.msra.mxu0 %v1225
    %1261 = vmatpush.msra.mxu0 %v1223
    %1262 = vmatpush.msra.mxu0 %v1221
    %1263 = vmatpush.msra.mxu0 %v1219
    %1264 = vmatpush.msra.mxu0 %v1217
    %1265 = vmatmul.f32.gmra.mxu0 %v152
    %v1266 = vpop.f32.mrf.mxu0
    %v1267 = vadd.f32 0.0, %v1266
    %1268 = vmatmul.f32.gmra.mxu0 %v153
    %v1269 = vpop.f32.mrf.mxu0
    %v1270 = vadd.f32 0.0, %v1269
    %1271 = vmatmul.f32.gmra.mxu0 %v154
    %v1272 = vpop.f32.mrf.mxu0
    %v1273 = vadd.f32 0.0, %v1272
    %1274 = vmatmul.f32.gmra.mxu0 %v155
    %v1275 = vpop.f32.mrf.mxu0
    %v1276 = vadd.f32 0.0, %v1275
    %1277 = vdwg.mxu0
    %1278 = vmatpush.msra.mxu0 %v1248
    %1279 = vmatpush.msra.mxu0 %v1246
    %1280 = vmatpush.msra.mxu0 %v1244
    %1281 = vmatpush.msra.mxu0 %v1242
    %1282 = vmatpush.msra.mxu0 %v1240
    %1283 = vmatpush.msra.mxu0 %v1238
    %1284 = vmatpush.msra.mxu0 %v1236
    %1285 = vmatpush.msra.mxu0 %v1234
    %1286 = vmatpush.msra.mxu0 %v1232
    %1287 = vmatpush.msra.mxu0 %v1230
    %1288 = vmatpush.msra.mxu0 %v1228
    %1289 = vmatpush.msra.mxu0 %v1226
    %1290 = vmatpush.msra.mxu0 %v1224
    %1291 = vmatpush.msra.mxu0 %v1222
    %1292 = vmatpush.msra.mxu0 %v1220
    %1293 = vmatpush.msra.mxu0 %v1218
    %1294 = vmatmul.f32.gmra.mxu0 %v152
    %v1295 = vpop.f32.mrf.mxu0
    %v1296 = vadd.f32 0.0, %v1295
    %1297 = vmatmul.f32.gmra.mxu0 %v153
    %v1298 = vpop.f32.mrf.mxu0
    %v1299 = vadd.f32 0.0, %v1298
    %1300 = vmatmul.f32.gmra.mxu0 %v154
    %v1301 = vpop.f32.mrf.mxu0
    %v1302 = vadd.f32 0.0, %v1301
    %1303 = vmatmul.f32.gmra.mxu0 %v155
    %v1304 = vpop.f32.mrf.mxu0
    %v1305 = vadd.f32 0.0, %v1304
    %1306 = vdwg.mxu0
    %1307 = vmatpush.msra.mxu0 0.0
    %1308 = vmatpush.msra.mxu0 0.0
    %1309 = vmatpush.msra.mxu0 0.0
    %1310 = vmatpush.msra.mxu0 0.0
    %1311 = vmatpush.msra.mxu0 0.0
    %1312 = vmatpush.msra.mxu0 0.0
    %1313 = vmatpush.msra.mxu0 0.0
    %1314 = vmatpush.msra.mxu0 0.0
    %1315 = vmatpush.msra.mxu0 0.0
    %1316 = vmatpush.msra.mxu0 0.0
    %1317 = vmatpush.msra.mxu0 0.0
    %1318 = vmatpush.msra.mxu0 0.0
    %1319 = vmatpush.msra.mxu0 0.0
    %1320 = vmatpush.msra.mxu0 0.0
    %1321 = vmatpush.msra.mxu0 0.0
    %1322 = vmatpush.msra.mxu0 %v1194
    %1323 = vmatmul.f32.gmra.mxu0 %v444
    %v1324 = vpop.f32.mrf.mxu0
    %v1325 = vadd.f32 %v1267, %v1324
    %1326 = vmatmul.f32.gmra.mxu0 %v447
    %v1327 = vpop.f32.mrf.mxu0
    %v1328 = vadd.f32 %v1270, %v1327
    %1329 = vmatmul.f32.gmra.mxu0 %v450
    %v1330 = vpop.f32.mrf.mxu0
    %v1331 = vadd.f32 %v1273, %v1330
    %1332 = vmatmul.f32.gmra.mxu0 %v453
    %v1333 = vpop.f32.mrf.mxu0
    %v1334 = vadd.f32 %v1276, %v1333
    %1335 = vdwg.mxu0
    %1336 = vmatpush.msra.mxu0 0.0
    %1337 = vmatpush.msra.mxu0 0.0
    %1338 = vmatpush.msra.mxu0 0.0
    %1339 = vmatpush.msra.mxu0 0.0
    %1340 = vmatpush.msra.mxu0 0.0
    %1341 = vmatpush.msra.mxu0 0.0
    %1342 = vmatpush.msra.mxu0 0.0
    %1343 = vmatpush.msra.mxu0 0.0
    %1344 = vmatpush.msra.mxu0 0.0
    %1345 = vmatpush.msra.mxu0 0.0
    %1346 = vmatpush.msra.mxu0 0.0
    %1347 = vmatpush.msra.mxu0 0.0
    %1348 = vmatpush.msra.mxu0 0.0
    %1349 = vmatpush.msra.mxu0 0.0
    %1350 = vmatpush.msra.mxu0 0.0
    %1351 = vmatpush.msra.mxu0 %v1214
    %1352 = vmatmul.f32.gmra.mxu0 %v444
    %v1353 = vpop.f32.mrf.mxu0
    %v1354 = vadd.f32 %v1296, %v1353
    %1355 = vmatmul.f32.gmra.mxu0 %v447
    %v1356 = vpop.f32.mrf.mxu0
    %v1357 = vadd.f32 %v1299, %v1356
    %1358 = vmatmul.f32.gmra.mxu0 %v450
    %v1359 = vpop.f32.mrf.mxu0
    %v1360 = vadd.f32 %v1302, %v1359
    %1361 = vmatmul.f32.gmra.mxu0 %v453
    %v1362 = vpop.f32.mrf.mxu0
    %v1363 = vadd.f32 %v1305, %v1362
    %1364 = vdwg.mxu0
    %v1365 = vadd.f32 %v1325, %v1121
    %v1366 = vadd.f32 %v1354, %v1141
    %v1367 = vsub.f32 0.0, %v1365
    %v1368 = vmul.f32 %v1367, 1.442695
    %v1369 = vpow.pop %v1368
    %v1370 = vadd.f32 %v1369, 1.0
    %v1371 = vrcp.pop %v1370
    %v1372 = vmax.f32 %v1366, 0.0
    %v1373 = vand.u32 2147483647, %v1366
    %v1374 = vsub.f32 0.0, %v1373
    %v1375 = vmul.f32 %v1374, 1.442695
    %v1376 = vpow.pop %v1375
    %v1377 = vadd.f32 %v1376, 1.0
    %v1378 = vlog2.pop %v1377
    %v1379 = vmul.f32 %v1378, 0.6931472
    %v1380 = vmul.f32 -0.5, %v1376
    %v1381 = vadd.f32 %v1380, 1.0
    %v1382 = vmul.f32 %v1381, %v1376
    %v1383 = vand.u32 2147483647, %v1376
    %vm1384 = vcmp.lt.f32.partialorder %v1383, 0.0004427343
    %v1385 = vsel %vm1384, %v1382, %v1379
    %v1386 = vadd.f32 %v1372, %v1385
    %v1387 = vmul.f32 %v1371, %v1386
    %v1388 = vadd.f32 %v1387, 0.0
    %v1389 = vadd.f32 %v1328, %v1121
    %v1390 = vadd.f32 %v1357, %v1141
    %v1391 = vsub.f32 0.0, %v1389
    %v1392 = vmul.f32 %v1391, 1.442695
    %v1393 = vpow.pop %v1392
    %v1394 = vadd.f32 %v1393, 1.0
    %v1395 = vrcp.pop %v1394
    %v1396 = vmax.f32 %v1390, 0.0
    %v1397 = vand.u32 2147483647, %v1390
    %v1398 = vsub.f32 0.0, %v1397
    %v1399 = vmul.f32 %v1398, 1.442695
    %v1400 = vpow.pop %v1399
    %v1401 = vadd.f32 %v1400, 1.0
    %v1402 = vlog2.pop %v1401
    %v1403 = vmul.f32 %v1402, 0.6931472
    %v1404 = vmul.f32 -0.5, %v1400
    %v1405 = vadd.f32 %v1404, 1.0
    %v1406 = vmul.f32 %v1405, %v1400
    %v1407 = vand.u32 2147483647, %v1400
    %vm1408 = vcmp.lt.f32.partialorder %v1407, 0.0004427343
    %v1409 = vsel %vm1408, %v1406, %v1403
    %v1410 = vadd.f32 %v1396, %v1409
    %v1411 = vmul.f32 %v1395, %v1410
    %v1412 = vadd.f32 %v1388, %v1411
    %v1413 = vadd.f32 %v1331, %v1121
    %v1414 = vadd.f32 %v1360, %v1141
    %v1415 = vsub.f32 0.0, %v1413
    %v1416 = vmul.f32 %v1415, 1.442695
    %v1417 = vpow.pop %v1416
    %v1418 = vadd.f32 %v1417, 1.0
    %v1419 = vrcp.pop %v1418
    %v1420 = vmax.f32 %v1414, 0.0
    %v1421 = vand.u32 2147483647, %v1414
    %v1422 = vsub.f32 0.0, %v1421
    %v1423 = vmul.f32 %v1422, 1.442695
    %v1424 = vpow.pop %v1423
    %v1425 = vadd.f32 %v1424, 1.0
    %v1426 = vlog2.pop %v1425
    %v1427 = vmul.f32 %v1426, 0.6931472
    %v1428 = vmul.f32 -0.5, %v1424
    %v1429 = vadd.f32 %v1428, 1.0
    %v1430 = vmul.f32 %v1429, %v1424
    %v1431 = vand.u32 2147483647, %v1424
    %vm1432 = vcmp.lt.f32.partialorder %v1431, 0.0004427343
    %v1433 = vsel %vm1432, %v1430, %v1427
    %v1434 = vadd.f32 %v1420, %v1433
    %v1435 = vmul.f32 %v1419, %v1434
    %v1436 = vadd.f32 %v1412, %v1435
    %v1437 = vadd.f32 %v1334, %v1121
    %v1438 = vadd.f32 %v1363, %v1141
    %v1439 = vsub.f32 0.0, %v1437
    %v1440 = vmul.f32 %v1439, 1.442695
    %v1441 = vpow.pop %v1440
    %v1442 = vadd.f32 %v1441, 1.0
    %v1443 = vrcp.pop %v1442
    %v1444 = vmax.f32 %v1438, 0.0
    %v1445 = vand.u32 2147483647, %v1438
    %v1446 = vsub.f32 0.0, %v1445
    %v1447 = vmul.f32 %v1446, 1.442695
    %v1448 = vpow.pop %v1447
    %v1449 = vadd.f32 %v1448, 1.0
    %v1450 = vlog2.pop %v1449
    %v1451 = vmul.f32 %v1450, 0.6931472
    %v1452 = vmul.f32 -0.5, %v1448
    %v1453 = vadd.f32 %v1452, 1.0
    %v1454 = vmul.f32 %v1453, %v1448
    %v1455 = vand.u32 2147483647, %v1448
    %vm1456 = vcmp.lt.f32.partialorder %v1455, 0.0004427343
    %v1457 = vsel %vm1456, %v1454, %v1451
    %v1458 = vadd.f32 %v1444, %v1457
    %v1459 = vmul.f32 %v1443, %v1458
    %v1460 = vadd.f32 %v1436, %v1459
    %s1461 = scalar_lea.vmem %s10, 2
    %v1462 = vld [vmem:[%s1461] sm:$0x1]
    %v1464 = vperm.slane %v1462, 0
    %v1466 = vmul.f32 %v1460, %v1464
    %s1467 = scalar_lea.vmem [#allocation13], 2
    %v1468 = vld [vmem:[%s1467] sm:$0x1]
    %v1470 = vperm.slane %v1468, 0
    %v1472 = vadd.f32 %v1466, %v1470
    %v1473 = vadd.f32 %v1062, %v1472
    %v1474 = vmax.f32 %v1473, 0.0
    %v1475 = vand.u32 2147483647, %v1473
    %v1476 = vsub.f32 0.0, %v1475
    %v1477 = vmul.f32 %v1476, 1.442695
    %v1478 = vpow.pop %v1477
    %v1479 = vadd.f32 %v1478, 1.0
    %v1480 = vlog2.pop %v1479
    %v1481 = vmul.f32 %v1480, 0.6931472
    %v1482 = vmul.f32 -0.5, %v1478
    %v1483 = vadd.f32 %v1482, 1.0
    %v1484 = vmul.f32 %v1483, %v1478
    %v1485 = vand.u32 2147483647, %v1478
    %vm1486 = vcmp.lt.f32.partialorder %v1485, 0.0004427343
    %v1487 = vsel %vm1486, %v1484, %v1481
    %v1488 = vadd.f32 %v1474, %v1487
    %v1489 = vmul.f32 %v1488, %v151
    %v1490 = vld [vmem:[#allocation2] sm:$0x3]
    %v1492 = vsel %vm442, %v1490, 0
    %1494 = vmatpush.msra.mxu0 0.0
    %1495 = vmatpush.msra.mxu0 0.0
    %1496 = vmatpush.msra.mxu0 0.0
    %1497 = vmatpush.msra.mxu0 0.0
    %1498 = vmatpush.msra.mxu0 0.0
    %1499 = vmatpush.msra.mxu0 0.0
    %1500 = vmatpush.msra.mxu0 0.0
    %1501 = vmatpush.msra.mxu0 0.0
    %1502 = vmatpush.msra.mxu0 0.0
    %1503 = vmatpush.msra.mxu0 0.0
    %1504 = vmatpush.msra.mxu0 0.0
    %1505 = vmatpush.msra.mxu0 0.0
    %1506 = vmatpush.msra.mxu0 0.0
    %1507 = vmatpush.msra.mxu0 0.0
    %1508 = vmatpush.msra.mxu0 0.0
    %1509 = vmatpush.msra.mxu0 %v1489
    %1510 = vmatmul.f32.gmra.mxu0 %v1492
    %v1511 = vpop.f32.mrf.mxu0
    %v1512 = vadd.f32 0.0, %v1511
    %1513 = vdwg.mxu0
    %1514 = vst [vmem:[#allocation14] sm:$0x3] %v1512
    // Predicated region
    $region78: #{tpu_custom_call.1} parent=1 // pred_check
      _
    $region79: #{tpu_custom_call.1} parent=1 // pred_check_branch
      %1516 = sbr.rel (0) target = $region81
    $region80: #{tpu_custom_call.1} parent=1 // pred_region
      %1518 = vsyncadd [#allocation4], 0
      %s1520 = sshll.u32 [#allocation14], 4
      %s1521 = int_to_ptr.vmem [resolvable:$true] %s1520
      %s1522 = sshll.u32 %s12, 4
      %s1523 = int_to_ptr.hbm [resolvable:$true] %s1522
      %1525 = dma.vmem_to_hbm [thread:$0]  %s1521, 32, %s1523, [#allocation4]
    $region81: #{tpu_custom_call.1} parent=1 // pred_fallthru
      _
    // Predicated region
    $region82: #{tpu_custom_call.1} parent=1 // pred_check
      _
    $region83: #{tpu_custom_call.1} parent=1 // pred_check_branch
      %1527 = sbr.rel (0) target = $region85
    $region84: #{tpu_custom_call.1} parent=1 // pred_region
      %1529 = dma.done [#allocation4], 32
    $region85: #{tpu_custom_call.1} parent=1 // pred_fallthru
      _
    %1530 = vsyncpa [#allocation3], 1
    %1531 = vsyncpa [#allocation6], 1
    %1532 = vsyncpa [#allocation9], 1
    %1533 = vsyncpa [#allocation12], 1
    %1534 = vsyncpa [#allocation4], 1

</llo_original>
